<compile_context>
chip_gen: v6e
topology: v6e:2x2x1
jax: 0.10.0
libtpu: 0.0.40
codegen_flags: <defaults>
</compile_context>

<pallas_src>
import functools
import math

import jax
import jax.numpy as jnp
import numpy as np
from jax import lax
from jax.experimental import pallas as pl
from jax.experimental.pallas import tpu as pltpu

K = 7     # conv kernel size
PAD = 3   # spatial padding ("same" conv)


def _make_separable_masks(H, W):
    """Separable zero-pad validity masks.

    colmask[j, 0, p] = 1.0 iff column tap dj=j-3 reads a valid column at p.
    rowmask[i, 0, p] = 1.0 iff row    tap di=i-3 reads a valid row    at p.
    (rowmask * colmask reproduces the full 7x7 zero-padding mask exactly.)
    """
    xs = np.arange(W)
    ys = np.arange(H)
    col = np.zeros((K, 1, H * W), np.float32)
    row = np.zeros((K, 1, H * W), np.float32)
    for j in range(K):
        dj = j - PAD
        vx = ((xs + dj >= 0) & (xs + dj < W)).astype(np.float32)   # (W,)
        col[j, 0, :] = np.tile(vx, H)
    for i in range(K):
        di = i - PAD
        vy = ((ys + di >= 0) & (ys + di < H)).astype(np.float32)   # (H,)
        row[i, 0, :] = np.repeat(vy, W)
    return jnp.asarray(col), jnp.asarray(row)


def _spatial_attention_kernel(wcol_ref, colmask_ref, rowmask_ref, b_ref,
                              x_ref, o_ref, pool_ref, *, img_w):
    # wcol_ref:    (K*K, 2*bt, 1) f32  per-tap per-plane weights (avg-plane
    #                                  weights already divided by C)
    # colmask_ref: (K, 1, HW)     f32  column (dj) zero-pad validity
    # rowmask_ref: (K, 1, HW)     f32  row (di) zero-pad validity
    # b_ref:       (1,)           f32  SMEM conv bias
    # x_ref:       (bt, ct, HW)        input channel block (native dtype)
    # o_ref:       (bt, 1, HW)         sigmoid spatial attention map
    # pool_ref:    (2*bt, HW)     f32  rows [0:bt] running channel-sum,
    #                                  rows [bt:2bt] running channel-max
    ci = pl.program_id(1)
    bt = o_ref.shape[0]
    hw = o_ref.shape[2]
    ct = x_ref.shape[1]

    @pl.when(ci == 0)
    def _init():
        pool_ref[0:bt, :] = jnp.zeros((bt, hw), jnp.float32)
        pool_ref[bt:, :] = jnp.full((bt, hw), -jnp.inf, jnp.float32)

    # ---- fused single-pass channel sum + max over this channel block ----
    s = pool_ref[0:bt, :]
    m = pool_ref[bt:, :]
    if ct <= 32:                                     # static: fully unrolled
        for c in range(ct):
            v = x_ref[:, c, :].astype(jnp.float32)
            s = s + v
            m = jnp.maximum(m, v)
    else:                                            # large channel blocks
        def body(c, carry):
            sc, mc = carry
            v = x_ref[:, c, :].astype(jnp.float32)
            return sc + v, jnp.maximum(mc, v)
        s, m = lax.fori_loop(0, ct, body, (s, m))
    pool_ref[0:bt, :] = s
    pool_ref[bt:, :] = m

    # ---- last channel step: factorized 7x7 "same" conv + sigmoid ----
    @pl.when(ci == pl.num_programs(1) - 1)
    def _finalize():
        stacked = pool_ref[...]                      # (2*bt, HW): [sum ; max]

        # Phase A: 7 column-offset (dj) lane rolls shared by both planes;
        # zero padding along x handled by the separable column mask.
        rolled = []
        for j in range(K):
            dj = j - PAD
            shift = (-dj) % hw
            r = stacked if shift == 0 else pltpu.roll(stacked, shift, axis=1)
            rolled.append(r * colmask_ref[j])        # (2*bt, HW)

        # Phase B: per row-offset (di), weighted sum over dj using the
        # precomputed per-plane column weights (broadcast (2*bt,1) multiply).
        # Phase C: one lane roll by di*W per di + row mask, 2 accumulators.
        acc0 = None
        acc1 = None
        for i in range(K):
            di = i - PAD
            p0 = rolled[0] * wcol_ref[i * K + 0]
            p1 = rolled[1] * wcol_ref[i * K + 1]
            for j in range(2, K - 1, 2):
                p0 = p0 + rolled[j] * wcol_ref[i * K + j]
                p1 = p1 + rolled[j + 1] * wcol_ref[i * K + j + 1]
            inner = p0 + p1 + rolled[K - 1] * wcol_ref[i * K + (K - 1)]
            shift = (-(di * img_w)) % hw
            ri = inner if shift == 0 else pltpu.roll(inner, shift, axis=1)
            term = ri * rowmask_ref[i]
            if i % 2 == 0:
                acc0 = term if acc0 is None else acc0 + term
            else:
                acc1 = term if acc1 is None else acc1 + term
        conv2 = acc0 + acc1                          # (2*bt, HW)
        # Sum the two input-plane contributions + bias.
        conv = conv2[0:bt, :] + conv2[bt:, :] + b_ref[0]     # (bt, HW)

        # Sigmoid: exp hits the EUP; exact divide keeps 1e-5 parity with the
        # reference (approx reciprocal would be ~1e-4 error).
        out = 1.0 / (1.0 + jnp.exp(-conv))
        o_ref[...] = out[:, None, :].astype(o_ref.dtype)


def _vmem_budget():
    """Generation-aware (limit, per-step input block budget) in bytes."""
    try:
        info = pltpu.get_tpu_info()
        cap = int(getattr(info, "vmem_capacity_bytes", 64 * 1024 * 1024))
    except Exception:
        cap = 64 * 1024 * 1024                       # conservative fallback
    vmem_limit = min(int(cap * 0.75), 100 * 1024 * 1024)   # v6e/v5e ~96M, v7x ~48M
    blk_budget = int(vmem_limit * 0.30)              # leaves room for 2x buffering
    return vmem_limit, blk_budget


def _pick_tiles(B, C, HW, itemsize, blk_budget):
    """Choose (batch_tile, channel_tile) for the (bt, ct, HW) input block."""
    per_b = C * HW * itemsize
    if per_b <= blk_budget:
        bt = max(1, min(B, blk_budget // per_b))
        if B >= 2:
            bt = min(bt, -(-B // 2))     # keep >= 2 grid steps (v7x: 2 TCs)
        bt = min(bt, 64)                 # bounds wcol footprint / live temporaries
        return bt, C
    # One batch row of x does not fit the budget: tile channels (multiple of 8
    # dividing C so the BlockSpec second-minor constraint holds).
    ct = max(8, (blk_budget // (HW * itemsize)) // 8 * 8)
    ct = min(ct, C)
    while ct > 8 and (C % ct):
        ct -= 8
    if C % ct:
        # TODO(synk): masked ragged channel tail instead of this fallback.
        ct = C
    return 1, ct


def spatial_attention(x, weight, bias):
    """x: (B, C, H, W); weight: (1, 2, K, K) OIHW; bias: (1,). -> (B, 1, H, W)."""
    B, C, H, W = x.shape
    HW = H * W
    x_flat = x.reshape(B, C, HW)                     # native dtype, lane-dense HW

    vmem_limit, blk_budget = _vmem_budget()
    itemsize = jnp.dtype(x.dtype).itemsize
    bt, ct = _pick_tiles(B, C, HW, itemsize, blk_budget)
    n_b = pl.cdiv(B, bt)
    n_c = pl.cdiv(C, ct)

    colmask, rowmask = _make_separable_masks(H, W)

    # Per-tap, per-plane column weights.  Row layout matches the sublane-stacked
    # pooled planes: first bt rows = avg plane (weights pre-divided by C so the
    # kernel only needs the channel *sum*), last bt rows = max plane.
    w2 = weight.reshape(2, K * K).astype(jnp.float32)          # (plane, tap)
    w2 = w2 * jnp.array([[1.0 / C], [1.0]], jnp.float32)
    wcol = jnp.repeat(w2.T, bt, axis=1)[:, :, None]            # (K*K, 2*bt, 1)

    bias_f = bias.reshape(1).astype(jnp.float32)

    kernel = functools.partial(_spatial_attention_kernel, img_w=W)
    out = pl.pallas_call(
        kernel,
        out_shape=jax.ShapeDtypeStruct((B, 1, HW), x.dtype),
        grid=(n_b, n_c),
        in_specs=[
            pl.BlockSpec((K * K, 2 * bt, 1), lambda bi, ci: (0, 0, 0)),  # weights
            pl.BlockSpec((K, 1, HW), lambda bi, ci: (0, 0, 0)),          # colmask
            pl.BlockSpec((K, 1, HW), lambda bi, ci: (0, 0, 0)),          # rowmask
            pl.BlockSpec(memory_space=pltpu.MemorySpace.SMEM),           # bias
            pl.BlockSpec((bt, ct, HW), lambda bi, ci: (bi, ci, 0)),      # x block
        ],
        out_specs=pl.BlockSpec((bt, 1, HW), lambda bi, ci: (bi, 0, 0)),
        scratch_shapes=[pltpu.VMEM((2 * bt, HW), jnp.float32)],          # sum/max
        compiler_params=pltpu.CompilerParams(
            dimension_semantics=("parallel", "arbitrary"),
            vmem_limit_bytes=vmem_limit),
    )(wcol, colmask, rowmask, bias_f, x_flat)
    return out.reshape(B, 1, H, W)


def _reference(x, weight, bias):
    avg = jnp.mean(x, axis=1, keepdims=True)
    mx = jnp.max(x, axis=1, keepdims=True)
    out = jnp.concatenate([avg, mx], axis=1)
    conv = lax.conv_general_dilated(
        out, weight, window_strides=(1, 1),
        padding=((PAD, PAD), (PAD, PAD)),
        dimension_numbers=("NCHW", "OIHW", "NCHW"))
    return jax.nn.sigmoid(conv + bias.reshape(1, 1, 1, 1))


if __name__ == "__main__":
    key = jax.random.PRNGKey(0)
    kx, kw, kb = jax.random.split(key, 3)

    B, C, H, W = 2, 4, 16, 16
    x = jax.random.normal(kx, (B, C, H, W), dtype=jnp.float32)

    # Deterministic init mimicking nn.Conv2d default (uniform +/- 1/sqrt(fan_in)).
    fan_in = 2 * K * K
    bound = 1.0 / math.sqrt(fan_in)
    weight = jax.random.uniform(kw, (1, 2, K, K), jnp.float32, -bound, bound)
    bias = jax.random.uniform(kb, (1,), jnp.float32, -bound, bound)

    out = spatial_attention(x, weight, bias)
    out = jax.block_until_ready(out)

    ref = _reference(x, weight, bias)
    assert out.shape == (B, 1, H, W)
    assert jnp.allclose(out, ref, atol=1e-5, rtol=1e-5), "mismatch vs JAX reference"
    print("KERNEL_OK")
</pallas_src>

<mosaic_0001>
module attributes {stable_mosaic.version = 11 : i64} {
  func.func @_spatial_attention_kernel(%arg0: i32, %arg1: i32, %arg2: memref<49x2x1xf32, #tpu.memory_space<vmem>>, %arg3: memref<7x1x256xf32, #tpu.memory_space<vmem>>, %arg4: memref<7x1x256xf32, #tpu.memory_space<vmem>>, %arg5: memref<1xf32, #tpu.memory_space<smem>>, %arg6: memref<1x4x256xf32, #tpu.memory_space<vmem>>, %arg7: memref<1x1x256xf32, #tpu.memory_space<vmem>>, %arg8: memref<2x256xf32, #tpu.memory_space<vmem>>) attributes {dimension_semantics = [#tpu.dimension_semantics<parallel>, #tpu.dimension_semantics<arbitrary>], iteration_bounds = array<i64: 2, 1>, scalar_prefetch = 0 : i64, scratch_operands = 1 : i64, tpu.core_type = #tpu.core_type<tc>, window_params = [{pipeline_mode = #tpu.pipeline_mode<synchronous>, transform_indices = @transform_0, window_bounds = array<i64: 49, 2, 1>}, {pipeline_mode = #tpu.pipeline_mode<synchronous>, transform_indices = @transform_1, window_bounds = array<i64: 7, 1, 256>}, {pipeline_mode = #tpu.pipeline_mode<synchronous>, transform_indices = @transform_2, window_bounds = array<i64: 7, 1, 256>}, {transform_indices = @transform_3, window_bounds = array<i64: 1>}, {transform_indices = @transform_4, window_bounds = array<i64: 1, 4, 256>}, {transform_indices = @transform_5, window_bounds = array<i64: 1, 1, 256>}]} {
    %c0_i32 = arith.constant 0 : i32
    %0 = arith.cmpi eq, %arg1, %c0_i32 : i32
    %1 = arith.extui %0 : i1 to i32
    %c0_i32_0 = arith.constant 0 : i32
    %2 = arith.cmpi ne, %1, %c0_i32_0 : i32
    scf.if %2 {
      %cst = arith.constant 0.000000e+00 : f32
      %26 = vector.broadcast %cst : f32 to vector<1x256xf32>
      %c0_19 = arith.constant 0 : index
      %c0_20 = arith.constant 0 : index
      %27 = vector.load %arg8[%c0_19, %c0_20] : memref<2x256xf32, #tpu.memory_space<vmem>>, vector<1x256xf32>
      tpu.vector_store %arg8[%c0_19, %c0_20], %26 {strides = array<i32>} : memref<2x256xf32, #tpu.memory_space<vmem>>, vector<1x256xf32>,
      %cst_21 = arith.constant 0xFF800000 : f32
      %28 = vector.broadcast %cst_21 : f32 to vector<1x256xf32>
      %c1_22 = arith.constant 1 : index
      %c0_23 = arith.constant 0 : index
      %29 = vector.load %arg8[%c1_22, %c0_23] : memref<2x256xf32, #tpu.memory_space<vmem>>, vector<1x256xf32>
      tpu.vector_store %arg8[%c1_22, %c0_23], %28 {strides = array<i32>} : memref<2x256xf32, #tpu.memory_space<vmem>>, vector<1x256xf32>,
    } else {
    }
    %c0 = arith.constant 0 : index
    %c0_1 = arith.constant 0 : index
    %3 = vector.load %arg8[%c0, %c0_1] : memref<2x256xf32, #tpu.memory_space<vmem>>, vector<1x256xf32>
    %c1 = arith.constant 1 : index
    %c0_2 = arith.constant 0 : index
    %4 = vector.load %arg8[%c1, %c0_2] : memref<2x256xf32, #tpu.memory_space<vmem>>, vector<1x256xf32>
    %c0_3 = arith.constant 0 : index
    %c0_4 = arith.constant 0 : index
    %c0_5 = arith.constant 0 : index
    %5 = vector.load %arg6[%c0_3, %c0_4, %c0_5] : memref<1x4x256xf32, #tpu.memory_space<vmem>>, vector<1x1x256xf32>
    %6 = vector.shape_cast %5 : vector<1x1x256xf32> to vector<1x256xf32>
    %7 = arith.addf %3, %6 : vector<1x256xf32>
    %8 = arith.maximumf %4, %6 : vector<1x256xf32>
    %c0_6 = arith.constant 0 : index
    %c1_7 = arith.constant 1 : index
    %c0_8 = arith.constant 0 : index
    %9 = vector.load %arg6[%c0_6, %c1_7, %c0_8] : memref<1x4x256xf32, #tpu.memory_space<vmem>>, vector<1x1x256xf32>
    %10 = vector.shape_cast %9 : vector<1x1x256xf32> to vector<1x256xf32>
    %11 = arith.addf %7, %10 : vector<1x256xf32>
    %12 = arith.maximumf %8, %10 : vector<1x256xf32>
    %c0_9 = arith.constant 0 : index
    %c2 = arith.constant 2 : index
    %c0_10 = arith.constant 0 : index
    %13 = vector.load %arg6[%c0_9, %c2, %c0_10] : memref<1x4x256xf32, #tpu.memory_space<vmem>>, vector<1x1x256xf32>
    %14 = vector.shape_cast %13 : vector<1x1x256xf32> to vector<1x256xf32>
    %15 = arith.addf %11, %14 : vector<1x256xf32>
    %16 = arith.maximumf %12, %14 : vector<1x256xf32>
    %c0_11 = arith.constant 0 : index
    %c3 = arith.constant 3 : index
    %c0_12 = arith.constant 0 : index
    %17 = vector.load %arg6[%c0_11, %c3, %c0_12] : memref<1x4x256xf32, #tpu.memory_space<vmem>>, vector<1x1x256xf32>
    %18 = vector.shape_cast %17 : vector<1x1x256xf32> to vector<1x256xf32>
    %19 = arith.addf %15, %18 : vector<1x256xf32>
    %20 = arith.maximumf %16, %18 : vector<1x256xf32>
    %c0_13 = arith.constant 0 : index
    %c0_14 = arith.constant 0 : index
    %21 = vector.load %arg8[%c0_13, %c0_14] : memref<2x256xf32, #tpu.memory_space<vmem>>, vector<1x256xf32>
    tpu.vector_store %arg8[%c0_13, %c0_14], %19 {strides = array<i32>} : memref<2x256xf32, #tpu.memory_space<vmem>>, vector<1x256xf32>,
    %c1_15 = arith.constant 1 : index
    %c0_16 = arith.constant 0 : index
    %22 = vector.load %arg8[%c1_15, %c0_16] : memref<2x256xf32, #tpu.memory_space<vmem>>, vector<1x256xf32>
    tpu.vector_store %arg8[%c1_15, %c0_16], %20 {strides = array<i32>} : memref<2x256xf32, #tpu.memory_space<vmem>>, vector<1x256xf32>,
    %c0_i32_17 = arith.constant 0 : i32
    %23 = arith.cmpi eq, %arg1, %c0_i32_17 : i32
    %24 = arith.extui %23 : i1 to i32
    %c0_i32_18 = arith.constant 0 : i32
    %25 = arith.cmpi ne, %24, %c0_i32_18 : i32
    scf.if %25 {
      %c0_19 = arith.constant 0 : index
      %c0_20 = arith.constant 0 : index
      %26 = vector.load %arg8[%c0_19, %c0_20] : memref<2x256xf32, #tpu.memory_space<vmem>>, vector<2x256xf32>
      %c3_i32 = arith.constant 3 : i32
      %27 = tpu.dynamic_rotate %26 by %c3_i32 dim 1 : vector<2x256xf32>, i32 -> vector<2x256xf32>
      %c0_21 = arith.constant 0 : index
      %c0_22 = arith.constant 0 : index
      %c0_23 = arith.constant 0 : index
      %28 = vector.load %arg3[%c0_21, %c0_22, %c0_23] : memref<7x1x256xf32, #tpu.memory_space<vmem>>, vector<1x1x256xf32>
      %29 = vector.shape_cast %28 : vector<1x1x256xf32> to vector<1x256xf32>
      %30 = vector.broadcast %29 : vector<1x256xf32> to vector<2x256xf32>
      %31 = arith.mulf %27, %30 : vector<2x256xf32>
      %c2_i32 = arith.constant 2 : i32
      %32 = tpu.dynamic_rotate %26 by %c2_i32 dim 1 : vector<2x256xf32>, i32 -> vector<2x256xf32>
      %c1_24 = arith.constant 1 : index
      %c0_25 = arith.constant 0 : index
      %c0_26 = arith.constant 0 : index
      %33 = vector.load %arg3[%c1_24, %c0_25, %c0_26] : memref<7x1x256xf32, #tpu.memory_space<vmem>>, vector<1x1x256xf32>
      %34 = vector.shape_cast %33 : vector<1x1x256xf32> to vector<1x256xf32>
      %35 = vector.broadcast %34 : vector<1x256xf32> to vector<2x256xf32>
      %36 = arith.mulf %32, %35 : vector<2x256xf32>
      %c1_i32 = arith.constant 1 : i32
      %37 = tpu.dynamic_rotate %26 by %c1_i32 dim 1 : vector<2x256xf32>, i32 -> vector<2x256xf32>
      %c2_27 = arith.constant 2 : index
      %c0_28 = arith.constant 0 : index
      %c0_29 = arith.constant 0 : index
      %38 = vector.load %arg3[%c2_27, %c0_28, %c0_29] : memref<7x1x256xf32, #tpu.memory_space<vmem>>, vector<1x1x256xf32>
      %39 = vector.shape_cast %38 : vector<1x1x256xf32> to vector<1x256xf32>
      %40 = vector.broadcast %39 : vector<1x256xf32> to vector<2x256xf32>
      %41 = arith.mulf %37, %40 : vector<2x256xf32>
      %c3_30 = arith.constant 3 : index
      %c0_31 = arith.constant 0 : index
      %c0_32 = arith.constant 0 : index
      %42 = vector.load %arg3[%c3_30, %c0_31, %c0_32] : memref<7x1x256xf32, #tpu.memory_space<vmem>>, vector<1x1x256xf32>
      %43 = vector.shape_cast %42 : vector<1x1x256xf32> to vector<1x256xf32>
      %44 = vector.broadcast %43 : vector<1x256xf32> to vector<2x256xf32>
      %45 = arith.mulf %26, %44 : vector<2x256xf32>
      %c255_i32 = arith.constant 255 : i32
      %46 = tpu.dynamic_rotate %26 by %c255_i32 dim 1 : vector<2x256xf32>, i32 -> vector<2x256xf32>
      %c4 = arith.constant 4 : index
      %c0_33 = arith.constant 0 : index
      %c0_34 = arith.constant 0 : index
      %47 = vector.load %arg3[%c4, %c0_33, %c0_34] : memref<7x1x256xf32, #tpu.memory_space<vmem>>, vector<1x1x256xf32>
      %48 = vector.shape_cast %47 : vector<1x1x256xf32> to vector<1x256xf32>
      %49 = vector.broadcast %48 : vector<1x256xf32> to vector<2x256xf32>
      %50 = arith.mulf %46, %49 : vector<2x256xf32>
      %c254_i32 = arith.constant 254 : i32
      %51 = tpu.dynamic_rotate %26 by %c254_i32 dim 1 : vector<2x256xf32>, i32 -> vector<2x256xf32>
      %c5 = arith.constant 5 : index
      %c0_35 = arith.constant 0 : index
      %c0_36 = arith.constant 0 : index
      %52 = vector.load %arg3[%c5, %c0_35, %c0_36] : memref<7x1x256xf32, #tpu.memory_space<vmem>>, vector<1x1x256xf32>
      %53 = vector.shape_cast %52 : vector<1x1x256xf32> to vector<1x256xf32>
      %54 = vector.broadcast %53 : vector<1x256xf32> to vector<2x256xf32>
      %55 = arith.mulf %51, %54 : vector<2x256xf32>
      %c253_i32 = arith.constant 253 : i32
      %56 = tpu.dynamic_rotate %26 by %c253_i32 dim 1 : vector<2x256xf32>, i32 -> vector<2x256xf32>
      %c6 = arith.constant 6 : index
      %c0_37 = arith.constant 0 : index
      %c0_38 = arith.constant 0 : index
      %57 = vector.load %arg3[%c6, %c0_37, %c0_38] : memref<7x1x256xf32, #tpu.memory_space<vmem>>, vector<1x1x256xf32>
      %58 = vector.shape_cast %57 : vector<1x1x256xf32> to vector<1x256xf32>
      %59 = vector.broadcast %58 : vector<1x256xf32> to vector<2x256xf32>
      %60 = arith.mulf %56, %59 : vector<2x256xf32>
      %c0_39 = arith.constant 0 : index
      %c0_40 = arith.constant 0 : index
      %c0_41 = arith.constant 0 : index
      %61 = vector.load %arg2[%c0_39, %c0_40, %c0_41] : memref<49x2x1xf32, #tpu.memory_space<vmem>>, vector<1x2x1xf32>
      %62 = vector.shape_cast %61 : vector<1x2x1xf32> to vector<2x1xf32>
      %63 = vector.broadcast %62 : vector<2x1xf32> to vector<2x256xf32>
      %64 = arith.mulf %31, %63 : vector<2x256xf32>
      %c1_42 = arith.constant 1 : index
      %c0_43 = arith.constant 0 : index
      %c0_44 = arith.constant 0 : index
      %65 = vector.load %arg2[%c1_42, %c0_43, %c0_44] : memref<49x2x1xf32, #tpu.memory_space<vmem>>, vector<1x2x1xf32>
      %66 = vector.shape_cast %65 : vector<1x2x1xf32> to vector<2x1xf32>
      %67 = vector.broadcast %66 : vector<2x1xf32> to vector<2x256xf32>
      %68 = arith.mulf %36, %67 : vector<2x256xf32>
      %c2_45 = arith.constant 2 : index
      %c0_46 = arith.constant 0 : index
      %c0_47 = arith.constant 0 : index
      %69 = vector.load %arg2[%c2_45, %c0_46, %c0_47] : memref<49x2x1xf32, #tpu.memory_space<vmem>>, vector<1x2x1xf32>
      %70 = vector.shape_cast %69 : vector<1x2x1xf32> to vector<2x1xf32>
      %71 = vector.broadcast %70 : vector<2x1xf32> to vector<2x256xf32>
      %72 = arith.mulf %41, %71 : vector<2x256xf32>
      %73 = arith.addf %64, %72 : vector<2x256xf32>
      %c3_48 = arith.constant 3 : index
      %c0_49 = arith.constant 0 : index
      %c0_50 = arith.constant 0 : index
      %74 = vector.load %arg2[%c3_48, %c0_49, %c0_50] : memref<49x2x1xf32, #tpu.memory_space<vmem>>, vector<1x2x1xf32>
      %75 = vector.shape_cast %74 : vector<1x2x1xf32> to vector<2x1xf32>
      %76 = vector.broadcast %75 : vector<2x1xf32> to vector<2x256xf32>
      %77 = arith.mulf %45, %76 : vector<2x256xf32>
      %78 = arith.addf %68, %77 : vector<2x256xf32>
      %c4_51 = arith.constant 4 : index
      %c0_52 = arith.constant 0 : index
      %c0_53 = arith.constant 0 : index
      %79 = vector.load %arg2[%c4_51, %c0_52, %c0_53] : memref<49x2x1xf32, #tpu.memory_space<vmem>>, vector<1x2x1xf32>
      %80 = vector.shape_cast %79 : vector<1x2x1xf32> to vector<2x1xf32>
      %81 = vector.broadcast %80 : vector<2x1xf32> to vector<2x256xf32>
      %82 = arith.mulf %50, %81 : vector<2x256xf32>
      %83 = arith.addf %73, %82 : vector<2x256xf32>
      %c5_54 = arith.constant 5 : index
      %c0_55 = arith.constant 0 : index
      %c0_56 = arith.constant 0 : index
      %84 = vector.load %arg2[%c5_54, %c0_55, %c0_56] : memref<49x2x1xf32, #tpu.memory_space<vmem>>, vector<1x2x1xf32>
      %85 = vector.shape_cast %84 : vector<1x2x1xf32> to vector<2x1xf32>
      %86 = vector.broadcast %85 : vector<2x1xf32> to vector<2x256xf32>
      %87 = arith.mulf %55, %86 : vector<2x256xf32>
      %88 = arith.addf %78, %87 : vector<2x256xf32>
      %89 = arith.addf %83, %88 : vector<2x256xf32>
      %c6_57 = arith.constant 6 : index
      %c0_58 = arith.constant 0 : index
      %c0_59 = arith.constant 0 : index
      %90 = vector.load %arg2[%c6_57, %c0_58, %c0_59] : memref<49x2x1xf32, #tpu.memory_space<vmem>>, vector<1x2x1xf32>
      %91 = vector.shape_cast %90 : vector<1x2x1xf32> to vector<2x1xf32>
      %92 = vector.broadcast %91 : vector<2x1xf32> to vector<2x256xf32>
      %93 = arith.mulf %60, %92 : vector<2x256xf32>
      %94 = arith.addf %89, %93 : vector<2x256xf32>
      %c48_i32 = arith.constant 48 : i32
      %95 = tpu.dynamic_rotate %94 by %c48_i32 dim 1 : vector<2x256xf32>, i32 -> vector<2x256xf32>
      %c0_60 = arith.constant 0 : index
      %c0_61 = arith.constant 0 : index
      %c0_62 = arith.constant 0 : index
      %96 = vector.load %arg4[%c0_60, %c0_61, %c0_62] : memref<7x1x256xf32, #tpu.memory_space<vmem>>, vector<1x1x256xf32>
      %97 = vector.shape_cast %96 : vector<1x1x256xf32> to vector<1x256xf32>
      %98 = vector.broadcast %97 : vector<1x256xf32> to vector<2x256xf32>
      %99 = arith.mulf %95, %98 : vector<2x256xf32>
      %c7 = arith.constant 7 : index
      %c0_63 = arith.constant 0 : index
      %c0_64 = arith.constant 0 : index
      %100 = vector.load %arg2[%c7, %c0_63, %c0_64] : memref<49x2x1xf32, #tpu.memory_space<vmem>>, vector<1x2x1xf32>
      %101 = vector.shape_cast %100 : vector<1x2x1xf32> to vector<2x1xf32>
      %102 = vector.broadcast %101 : vector<2x1xf32> to vector<2x256xf32>
      %103 = arith.mulf %31, %102 : vector<2x256xf32>
      %c8 = arith.constant 8 : index
      %c0_65 = arith.constant 0 : index
      %c0_66 = arith.constant 0 : index
      %104 = vector.load %arg2[%c8, %c0_65, %c0_66] : memref<49x2x1xf32, #tpu.memory_space<vmem>>, vector<1x2x1xf32>
      %105 = vector.shape_cast %104 : vector<1x2x1xf32> to vector<2x1xf32>
      %106 = vector.broadcast %105 : vector<2x1xf32> to vector<2x256xf32>
      %107 = arith.mulf %36, %106 : vector<2x256xf32>
      %c9 = arith.constant 9 : index
      %c0_67 = arith.constant 0 : index
      %c0_68 = arith.constant 0 : index
      %108 = vector.load %arg2[%c9, %c0_67, %c0_68] : memref<49x2x1xf32, #tpu.memory_space<vmem>>, vector<1x2x1xf32>
      %109 = vector.shape_cast %108 : vector<1x2x1xf32> to vector<2x1xf32>
      %110 = vector.broadcast %109 : vector<2x1xf32> to vector<2x256xf32>
      %111 = arith.mulf %41, %110 : vector<2x256xf32>
      %112 = arith.addf %103, %111 : vector<2x256xf32>
      %c10 = arith.constant 10 : index
      %c0_69 = arith.constant 0 : index
      %c0_70 = arith.constant 0 : index
      %113 = vector.load %arg2[%c10, %c0_69, %c0_70] : memref<49x2x1xf32, #tpu.memory_space<vmem>>, vector<1x2x1xf32>
      %114 = vector.shape_cast %113 : vector<1x2x1xf32> to vector<2x1xf32>
      %115 = vector.broadcast %114 : vector<2x1xf32> to vector<2x256xf32>
      %116 = arith.mulf %45, %115 : vector<2x256xf32>
      %117 = arith.addf %107, %116 : vector<2x256xf32>
      %c11 = arith.constant 11 : index
      %c0_71 = arith.constant 0 : index
      %c0_72 = arith.constant 0 : index
      %118 = vector.load %arg2[%c11, %c0_71, %c0_72] : memref<49x2x1xf32, #tpu.memory_space<vmem>>, vector<1x2x1xf32>
      %119 = vector.shape_cast %118 : vector<1x2x1xf32> to vector<2x1xf32>
      %120 = vector.broadcast %119 : vector<2x1xf32> to vector<2x256xf32>
      %121 = arith.mulf %50, %120 : vector<2x256xf32>
      %122 = arith.addf %112, %121 : vector<2x256xf32>
      %c12 = arith.constant 12 : index
      %c0_73 = arith.constant 0 : index
      %c0_74 = arith.constant 0 : index
      %123 = vector.load %arg2[%c12, %c0_73, %c0_74] : memref<49x2x1xf32, #tpu.memory_space<vmem>>, vector<1x2x1xf32>
      %124 = vector.shape_cast %123 : vector<1x2x1xf32> to vector<2x1xf32>
      %125 = vector.broadcast %124 : vector<2x1xf32> to vector<2x256xf32>
      %126 = arith.mulf %55, %125 : vector<2x256xf32>
      %127 = arith.addf %117, %126 : vector<2x256xf32>
      %128 = arith.addf %122, %127 : vector<2x256xf32>
      %c13 = arith.constant 13 : index
      %c0_75 = arith.constant 0 : index
      %c0_76 = arith.constant 0 : index
      %129 = vector.load %arg2[%c13, %c0_75, %c0_76] : memref<49x2x1xf32, #tpu.memory_space<vmem>>, vector<1x2x1xf32>
      %130 = vector.shape_cast %129 : vector<1x2x1xf32> to vector<2x1xf32>
      %131 = vector.broadcast %130 : vector<2x1xf32> to vector<2x256xf32>
      %132 = arith.mulf %60, %131 : vector<2x256xf32>
      %133 = arith.addf %128, %132 : vector<2x256xf32>
      %c32_i32 = arith.constant 32 : i32
      %134 = tpu.dynamic_rotate %133 by %c32_i32 dim 1 : vector<2x256xf32>, i32 -> vector<2x256xf32>
      %c1_77 = arith.constant 1 : index
      %c0_78 = arith.constant 0 : index
      %c0_79 = arith.constant 0 : index
      %135 = vector.load %arg4[%c1_77, %c0_78, %c0_79] : memref<7x1x256xf32, #tpu.memory_space<vmem>>, vector<1x1x256xf32>
      %136 = vector.shape_cast %135 : vector<1x1x256xf32> to vector<1x256xf32>
      %137 = vector.broadcast %136 : vector<1x256xf32> to vector<2x256xf32>
      %138 = arith.mulf %134, %137 : vector<2x256xf32>
      %c14 = arith.constant 14 : index
      %c0_80 = arith.constant 0 : index
      %c0_81 = arith.constant 0 : index
      %139 = vector.load %arg2[%c14, %c0_80, %c0_81] : memref<49x2x1xf32, #tpu.memory_space<vmem>>, vector<1x2x1xf32>
      %140 = vector.shape_cast %139 : vector<1x2x1xf32> to vector<2x1xf32>
      %141 = vector.broadcast %140 : vector<2x1xf32> to vector<2x256xf32>
      %142 = arith.mulf %31, %141 : vector<2x256xf32>
      %c15 = arith.constant 15 : index
      %c0_82 = arith.constant 0 : index
      %c0_83 = arith.constant 0 : index
      %143 = vector.load %arg2[%c15, %c0_82, %c0_83] : memref<49x2x1xf32, #tpu.memory_space<vmem>>, vector<1x2x1xf32>
      %144 = vector.shape_cast %143 : vector<1x2x1xf32> to vector<2x1xf32>
      %145 = vector.broadcast %144 : vector<2x1xf32> to vector<2x256xf32>
      %146 = arith.mulf %36, %145 : vector<2x256xf32>
      %c16 = arith.constant 16 : index
      %c0_84 = arith.constant 0 : index
      %c0_85 = arith.constant 0 : index
      %147 = vector.load %arg2[%c16, %c0_84, %c0_85] : memref<49x2x1xf32, #tpu.memory_space<vmem>>, vector<1x2x1xf32>
      %148 = vector.shape_cast %147 : vector<1x2x1xf32> to vector<2x1xf32>
      %149 = vector.broadcast %148 : vector<2x1xf32> to vector<2x256xf32>
      %150 = arith.mulf %41, %149 : vector<2x256xf32>
      %151 = arith.addf %142, %150 : vector<2x256xf32>
      %c17 = arith.constant 17 : index
      %c0_86 = arith.constant 0 : index
      %c0_87 = arith.constant 0 : index
      %152 = vector.load %arg2[%c17, %c0_86, %c0_87] : memref<49x2x1xf32, #tpu.memory_space<vmem>>, vector<1x2x1xf32>
      %153 = vector.shape_cast %152 : vector<1x2x1xf32> to vector<2x1xf32>
      %154 = vector.broadcast %153 : vector<2x1xf32> to vector<2x256xf32>
      %155 = arith.mulf %45, %154 : vector<2x256xf32>
      %156 = arith.addf %146, %155 : vector<2x256xf32>
      %c18 = arith.constant 18 : index
      %c0_88 = arith.constant 0 : index
      %c0_89 = arith.constant 0 : index
      %157 = vector.load %arg2[%c18, %c0_88, %c0_89] : memref<49x2x1xf32, #tpu.memory_space<vmem>>, vector<1x2x1xf32>
      %158 = vector.shape_cast %157 : vector<1x2x1xf32> to vector<2x1xf32>
      %159 = vector.broadcast %158 : vector<2x1xf32> to vector<2x256xf32>
      %160 = arith.mulf %50, %159 : vector<2x256xf32>
      %161 = arith.addf %151, %160 : vector<2x256xf32>
      %c19 = arith.constant 19 : index
      %c0_90 = arith.constant 0 : index
      %c0_91 = arith.constant 0 : index
      %162 = vector.load %arg2[%c19, %c0_90, %c0_91] : memref<49x2x1xf32, #tpu.memory_space<vmem>>, vector<1x2x1xf32>
      %163 = vector.shape_cast %162 : vector<1x2x1xf32> to vector<2x1xf32>
      %164 = vector.broadcast %163 : vector<2x1xf32> to vector<2x256xf32>
      %165 = arith.mulf %55, %164 : vector<2x256xf32>
      %166 = arith.addf %156, %165 : vector<2x256xf32>
      %167 = arith.addf %161, %166 : vector<2x256xf32>
      %c20 = arith.constant 20 : index
      %c0_92 = arith.constant 0 : index
      %c0_93 = arith.constant 0 : index
      %168 = vector.load %arg2[%c20, %c0_92, %c0_93] : memref<49x2x1xf32, #tpu.memory_space<vmem>>, vector<1x2x1xf32>
      %169 = vector.shape_cast %168 : vector<1x2x1xf32> to vector<2x1xf32>
      %170 = vector.broadcast %169 : vector<2x1xf32> to vector<2x256xf32>
      %171 = arith.mulf %60, %170 : vector<2x256xf32>
      %172 = arith.addf %167, %171 : vector<2x256xf32>
      %c16_i32 = arith.constant 16 : i32
      %173 = tpu.dynamic_rotate %172 by %c16_i32 dim 1 : vector<2x256xf32>, i32 -> vector<2x256xf32>
      %c2_94 = arith.constant 2 : index
      %c0_95 = arith.constant 0 : index
      %c0_96 = arith.constant 0 : index
      %174 = vector.load %arg4[%c2_94, %c0_95, %c0_96] : memref<7x1x256xf32, #tpu.memory_space<vmem>>, vector<1x1x256xf32>
      %175 = vector.shape_cast %174 : vector<1x1x256xf32> to vector<1x256xf32>
      %176 = vector.broadcast %175 : vector<1x256xf32> to vector<2x256xf32>
      %177 = arith.mulf %173, %176 : vector<2x256xf32>
      %178 = arith.addf %99, %177 : vector<2x256xf32>
      %c21 = arith.constant 21 : index
      %c0_97 = arith.constant 0 : index
      %c0_98 = arith.constant 0 : index
      %179 = vector.load %arg2[%c21, %c0_97, %c0_98] : memref<49x2x1xf32, #tpu.memory_space<vmem>>, vector<1x2x1xf32>
      %180 = vector.shape_cast %179 : vector<1x2x1xf32> to vector<2x1xf32>
      %181 = vector.broadcast %180 : vector<2x1xf32> to vector<2x256xf32>
      %182 = arith.mulf %31, %181 : vector<2x256xf32>
      %c22 = arith.constant 22 : index
      %c0_99 = arith.constant 0 : index
      %c0_100 = arith.constant 0 : index
      %183 = vector.load %arg2[%c22, %c0_99, %c0_100] : memref<49x2x1xf32, #tpu.memory_space<vmem>>, vector<1x2x1xf32>
      %184 = vector.shape_cast %183 : vector<1x2x1xf32> to vector<2x1xf32>
      %185 = vector.broadcast %184 : vector<2x1xf32> to vector<2x256xf32>
      %186 = arith.mulf %36, %185 : vector<2x256xf32>
      %c23 = arith.constant 23 : index
      %c0_101 = arith.constant 0 : index
      %c0_102 = arith.constant 0 : index
      %187 = vector.load %arg2[%c23, %c0_101, %c0_102] : memref<49x2x1xf32, #tpu.memory_space<vmem>>, vector<1x2x1xf32>
      %188 = vector.shape_cast %187 : vector<1x2x1xf32> to vector<2x1xf32>
      %189 = vector.broadcast %188 : vector<2x1xf32> to vector<2x256xf32>
      %190 = arith.mulf %41, %189 : vector<2x256xf32>
      %191 = arith.addf %182, %190 : vector<2x256xf32>
      %c24 = arith.constant 24 : index
      %c0_103 = arith.constant 0 : index
      %c0_104 = arith.constant 0 : index
      %192 = vector.load %arg2[%c24, %c0_103, %c0_104] : memref<49x2x1xf32, #tpu.memory_space<vmem>>, vector<1x2x1xf32>
      %193 = vector.shape_cast %192 : vector<1x2x1xf32> to vector<2x1xf32>
      %194 = vector.broadcast %193 : vector<2x1xf32> to vector<2x256xf32>
      %195 = arith.mulf %45, %194 : vector<2x256xf32>
      %196 = arith.addf %186, %195 : vector<2x256xf32>
      %c25 = arith.constant 25 : index
      %c0_105 = arith.constant 0 : index
      %c0_106 = arith.constant 0 : index
      %197 = vector.load %arg2[%c25, %c0_105, %c0_106] : memref<49x2x1xf32, #tpu.memory_space<vmem>>, vector<1x2x1xf32>
      %198 = vector.shape_cast %197 : vector<1x2x1xf32> to vector<2x1xf32>
      %199 = vector.broadcast %198 : vector<2x1xf32> to vector<2x256xf32>
      %200 = arith.mulf %50, %199 : vector<2x256xf32>
      %201 = arith.addf %191, %200 : vector<2x256xf32>
      %c26 = arith.constant 26 : index
      %c0_107 = arith.constant 0 : index
      %c0_108 = arith.constant 0 : index
      %202 = vector.load %arg2[%c26, %c0_107, %c0_108] : memref<49x2x1xf32, #tpu.memory_space<vmem>>, vector<1x2x1xf32>
      %203 = vector.shape_cast %202 : vector<1x2x1xf32> to vector<2x1xf32>
      %204 = vector.broadcast %203 : vector<2x1xf32> to vector<2x256xf32>
      %205 = arith.mulf %55, %204 : vector<2x256xf32>
      %206 = arith.addf %196, %205 : vector<2x256xf32>
      %207 = arith.addf %201, %206 : vector<2x256xf32>
      %c27 = arith.constant 27 : index
      %c0_109 = arith.constant 0 : index
      %c0_110 = arith.constant 0 : index
      %208 = vector.load %arg2[%c27, %c0_109, %c0_110] : memref<49x2x1xf32, #tpu.memory_space<vmem>>, vector<1x2x1xf32>
      %209 = vector.shape_cast %208 : vector<1x2x1xf32> to vector<2x1xf32>
      %210 = vector.broadcast %209 : vector<2x1xf32> to vector<2x256xf32>
      %211 = arith.mulf %60, %210 : vector<2x256xf32>
      %212 = arith.addf %207, %211 : vector<2x256xf32>
      %c3_111 = arith.constant 3 : index
      %c0_112 = arith.constant 0 : index
      %c0_113 = arith.constant 0 : index
      %213 = vector.load %arg4[%c3_111, %c0_112, %c0_113] : memref<7x1x256xf32, #tpu.memory_space<vmem>>, vector<1x1x256xf32>
      %214 = vector.shape_cast %213 : vector<1x1x256xf32> to vector<1x256xf32>
      %215 = vector.broadcast %214 : vector<1x256xf32> to vector<2x256xf32>
      %216 = arith.mulf %212, %215 : vector<2x256xf32>
      %217 = arith.addf %138, %216 : vector<2x256xf32>
      %c28 = arith.constant 28 : index
      %c0_114 = arith.constant 0 : index
      %c0_115 = arith.constant 0 : index
      %218 = vector.load %arg2[%c28, %c0_114, %c0_115] : memref<49x2x1xf32, #tpu.memory_space<vmem>>, vector<1x2x1xf32>
      %219 = vector.shape_cast %218 : vector<1x2x1xf32> to vector<2x1xf32>
      %220 = vector.broadcast %219 : vector<2x1xf32> to vector<2x256xf32>
      %221 = arith.mulf %31, %220 : vector<2x256xf32>
      %c29 = arith.constant 29 : index
      %c0_116 = arith.constant 0 : index
      %c0_117 = arith.constant 0 : index
      %222 = vector.load %arg2[%c29, %c0_116, %c0_117] : memref<49x2x1xf32, #tpu.memory_space<vmem>>, vector<1x2x1xf32>
      %223 = vector.shape_cast %222 : vector<1x2x1xf32> to vector<2x1xf32>
      %224 = vector.broadcast %223 : vector<2x1xf32> to vector<2x256xf32>
      %225 = arith.mulf %36, %224 : vector<2x256xf32>
      %c30 = arith.constant 30 : index
      %c0_118 = arith.constant 0 : index
      %c0_119 = arith.constant 0 : index
      %226 = vector.load %arg2[%c30, %c0_118, %c0_119] : memref<49x2x1xf32, #tpu.memory_space<vmem>>, vector<1x2x1xf32>
      %227 = vector.shape_cast %226 : vector<1x2x1xf32> to vector<2x1xf32>
      %228 = vector.broadcast %227 : vector<2x1xf32> to vector<2x256xf32>
      %229 = arith.mulf %41, %228 : vector<2x256xf32>
      %230 = arith.addf %221, %229 : vector<2x256xf32>
      %c31 = arith.constant 31 : index
      %c0_120 = arith.constant 0 : index
      %c0_121 = arith.constant 0 : index
      %231 = vector.load %arg2[%c31, %c0_120, %c0_121] : memref<49x2x1xf32, #tpu.memory_space<vmem>>, vector<1x2x1xf32>
      %232 = vector.shape_cast %231 : vector<1x2x1xf32> to vector<2x1xf32>
      %233 = vector.broadcast %232 : vector<2x1xf32> to vector<2x256xf32>
      %234 = arith.mulf %45, %233 : vector<2x256xf32>
      %235 = arith.addf %225, %234 : vector<2x256xf32>
      %c32 = arith.constant 32 : index
      %c0_122 = arith.constant 0 : index
      %c0_123 = arith.constant 0 : index
      %236 = vector.load %arg2[%c32, %c0_122, %c0_123] : memref<49x2x1xf32, #tpu.memory_space<vmem>>, vector<1x2x1xf32>
      %237 = vector.shape_cast %236 : vector<1x2x1xf32> to vector<2x1xf32>
      %238 = vector.broadcast %237 : vector<2x1xf32> to vector<2x256xf32>
      %239 = arith.mulf %50, %238 : vector<2x256xf32>
      %240 = arith.addf %230, %239 : vector<2x256xf32>
      %c33 = arith.constant 33 : index
      %c0_124 = arith.constant 0 : index
      %c0_125 = arith.constant 0 : index
      %241 = vector.load %arg2[%c33, %c0_124, %c0_125] : memref<49x2x1xf32, #tpu.memory_space<vmem>>, vector<1x2x1xf32>
      %242 = vector.shape_cast %241 : vector<1x2x1xf32> to vector<2x1xf32>
      %243 = vector.broadcast %242 : vector<2x1xf32> to vector<2x256xf32>
      %244 = arith.mulf %55, %243 : vector<2x256xf32>
      %245 = arith.addf %235, %244 : vector<2x256xf32>
      %246 = arith.addf %240, %245 : vector<2x256xf32>
      %c34 = arith.constant 34 : index
      %c0_126 = arith.constant 0 : index
      %c0_127 = arith.constant 0 : index
      %247 = vector.load %arg2[%c34, %c0_126, %c0_127] : memref<49x2x1xf32, #tpu.memory_space<vmem>>, vector<1x2x1xf32>
      %248 = vector.shape_cast %247 : vector<1x2x1xf32> to vector<2x1xf32>
      %249 = vector.broadcast %248 : vector<2x1xf32> to vector<2x256xf32>
      %250 = arith.mulf %60, %249 : vector<2x256xf32>
      %251 = arith.addf %246, %250 : vector<2x256xf32>
      %c240_i32 = arith.constant 240 : i32
      %252 = tpu.dynamic_rotate %251 by %c240_i32 dim 1 : vector<2x256xf32>, i32 -> vector<2x256xf32>
      %c4_128 = arith.constant 4 : index
      %c0_129 = arith.constant 0 : index
      %c0_130 = arith.constant 0 : index
      %253 = vector.load %arg4[%c4_128, %c0_129, %c0_130] : memref<7x1x256xf32, #tpu.memory_space<vmem>>, vector<1x1x256xf32>
      %254 = vector.shape_cast %253 : vector<1x1x256xf32> to vector<1x256xf32>
      %255 = vector.broadcast %254 : vector<1x256xf32> to vector<2x256xf32>
      %256 = arith.mulf %252, %255 : vector<2x256xf32>
      %257 = arith.addf %178, %256 : vector<2x256xf32>
      %c35 = arith.constant 35 : index
      %c0_131 = arith.constant 0 : index
      %c0_132 = arith.constant 0 : index
      %258 = vector.load %arg2[%c35, %c0_131, %c0_132] : memref<49x2x1xf32, #tpu.memory_space<vmem>>, vector<1x2x1xf32>
      %259 = vector.shape_cast %258 : vector<1x2x1xf32> to vector<2x1xf32>
      %260 = vector.broadcast %259 : vector<2x1xf32> to vector<2x256xf32>
      %261 = arith.mulf %31, %260 : vector<2x256xf32>
      %c36 = arith.constant 36 : index
      %c0_133 = arith.constant 0 : index
      %c0_134 = arith.constant 0 : index
      %262 = vector.load %arg2[%c36, %c0_133, %c0_134] : memref<49x2x1xf32, #tpu.memory_space<vmem>>, vector<1x2x1xf32>
      %263 = vector.shape_cast %262 : vector<1x2x1xf32> to vector<2x1xf32>
      %264 = vector.broadcast %263 : vector<2x1xf32> to vector<2x256xf32>
      %265 = arith.mulf %36, %264 : vector<2x256xf32>
      %c37 = arith.constant 37 : index
      %c0_135 = arith.constant 0 : index
      %c0_136 = arith.constant 0 : index
      %266 = vector.load %arg2[%c37, %c0_135, %c0_136] : memref<49x2x1xf32, #tpu.memory_space<vmem>>, vector<1x2x1xf32>
      %267 = vector.shape_cast %266 : vector<1x2x1xf32> to vector<2x1xf32>
      %268 = vector.broadcast %267 : vector<2x1xf32> to vector<2x256xf32>
      %269 = arith.mulf %41, %268 : vector<2x256xf32>
      %270 = arith.addf %261, %269 : vector<2x256xf32>
      %c38 = arith.constant 38 : index
      %c0_137 = arith.constant 0 : index
      %c0_138 = arith.constant 0 : index
      %271 = vector.load %arg2[%c38, %c0_137, %c0_138] : memref<49x2x1xf32, #tpu.memory_space<vmem>>, vector<1x2x1xf32>
      %272 = vector.shape_cast %271 : vector<1x2x1xf32> to vector<2x1xf32>
      %273 = vector.broadcast %272 : vector<2x1xf32> to vector<2x256xf32>
      %274 = arith.mulf %45, %273 : vector<2x256xf32>
      %275 = arith.addf %265, %274 : vector<2x256xf32>
      %c39 = arith.constant 39 : index
      %c0_139 = arith.constant 0 : index
      %c0_140 = arith.constant 0 : index
      %276 = vector.load %arg2[%c39, %c0_139, %c0_140] : memref<49x2x1xf32, #tpu.memory_space<vmem>>, vector<1x2x1xf32>
      %277 = vector.shape_cast %276 : vector<1x2x1xf32> to vector<2x1xf32>
      %278 = vector.broadcast %277 : vector<2x1xf32> to vector<2x256xf32>
      %279 = arith.mulf %50, %278 : vector<2x256xf32>
      %280 = arith.addf %270, %279 : vector<2x256xf32>
      %c40 = arith.constant 40 : index
      %c0_141 = arith.constant 0 : index
      %c0_142 = arith.constant 0 : index
      %281 = vector.load %arg2[%c40, %c0_141, %c0_142] : memref<49x2x1xf32, #tpu.memory_space<vmem>>, vector<1x2x1xf32>
      %282 = vector.shape_cast %281 : vector<1x2x1xf32> to vector<2x1xf32>
      %283 = vector.broadcast %282 : vector<2x1xf32> to vector<2x256xf32>
      %284 = arith.mulf %55, %283 : vector<2x256xf32>
      %285 = arith.addf %275, %284 : vector<2x256xf32>
      %286 = arith.addf %280, %285 : vector<2x256xf32>
      %c41 = arith.constant 41 : index
      %c0_143 = arith.constant 0 : index
      %c0_144 = arith.constant 0 : index
      %287 = vector.load %arg2[%c41, %c0_143, %c0_144] : memref<49x2x1xf32, #tpu.memory_space<vmem>>, vector<1x2x1xf32>
      %288 = vector.shape_cast %287 : vector<1x2x1xf32> to vector<2x1xf32>
      %289 = vector.broadcast %288 : vector<2x1xf32> to vector<2x256xf32>
      %290 = arith.mulf %60, %289 : vector<2x256xf32>
      %291 = arith.addf %286, %290 : vector<2x256xf32>
      %c224_i32 = arith.constant 224 : i32
      %292 = tpu.dynamic_rotate %291 by %c224_i32 dim 1 : vector<2x256xf32>, i32 -> vector<2x256xf32>
      %c5_145 = arith.constant 5 : index
      %c0_146 = arith.constant 0 : index
      %c0_147 = arith.constant 0 : index
      %293 = vector.load %arg4[%c5_145, %c0_146, %c0_147] : memref<7x1x256xf32, #tpu.memory_space<vmem>>, vector<1x1x256xf32>
      %294 = vector.shape_cast %293 : vector<1x1x256xf32> to vector<1x256xf32>
      %295 = vector.broadcast %294 : vector<1x256xf32> to vector<2x256xf32>
      %296 = arith.mulf %292, %295 : vector<2x256xf32>
      %297 = arith.addf %217, %296 : vector<2x256xf32>
      %c42 = arith.constant 42 : index
      %c0_148 = arith.constant 0 : index
      %c0_149 = arith.constant 0 : index
      %298 = vector.load %arg2[%c42, %c0_148, %c0_149] : memref<49x2x1xf32, #tpu.memory_space<vmem>>, vector<1x2x1xf32>
      %299 = vector.shape_cast %298 : vector<1x2x1xf32> to vector<2x1xf32>
      %300 = vector.broadcast %299 : vector<2x1xf32> to vector<2x256xf32>
      %301 = arith.mulf %31, %300 : vector<2x256xf32>
      %c43 = arith.constant 43 : index
      %c0_150 = arith.constant 0 : index
      %c0_151 = arith.constant 0 : index
      %302 = vector.load %arg2[%c43, %c0_150, %c0_151] : memref<49x2x1xf32, #tpu.memory_space<vmem>>, vector<1x2x1xf32>
      %303 = vector.shape_cast %302 : vector<1x2x1xf32> to vector<2x1xf32>
      %304 = vector.broadcast %303 : vector<2x1xf32> to vector<2x256xf32>
      %305 = arith.mulf %36, %304 : vector<2x256xf32>
      %c44 = arith.constant 44 : index
      %c0_152 = arith.constant 0 : index
      %c0_153 = arith.constant 0 : index
      %306 = vector.load %arg2[%c44, %c0_152, %c0_153] : memref<49x2x1xf32, #tpu.memory_space<vmem>>, vector<1x2x1xf32>
      %307 = vector.shape_cast %306 : vector<1x2x1xf32> to vector<2x1xf32>
      %308 = vector.broadcast %307 : vector<2x1xf32> to vector<2x256xf32>
      %309 = arith.mulf %41, %308 : vector<2x256xf32>
      %310 = arith.addf %301, %309 : vector<2x256xf32>
      %c45 = arith.constant 45 : index
      %c0_154 = arith.constant 0 : index
      %c0_155 = arith.constant 0 : index
      %311 = vector.load %arg2[%c45, %c0_154, %c0_155] : memref<49x2x1xf32, #tpu.memory_space<vmem>>, vector<1x2x1xf32>
      %312 = vector.shape_cast %311 : vector<1x2x1xf32> to vector<2x1xf32>
      %313 = vector.broadcast %312 : vector<2x1xf32> to vector<2x256xf32>
      %314 = arith.mulf %45, %313 : vector<2x256xf32>
      %315 = arith.addf %305, %314 : vector<2x256xf32>
      %c46 = arith.constant 46 : index
      %c0_156 = arith.constant 0 : index
      %c0_157 = arith.constant 0 : index
      %316 = vector.load %arg2[%c46, %c0_156, %c0_157] : memref<49x2x1xf32, #tpu.memory_space<vmem>>, vector<1x2x1xf32>
      %317 = vector.shape_cast %316 : vector<1x2x1xf32> to vector<2x1xf32>
      %318 = vector.broadcast %317 : vector<2x1xf32> to vector<2x256xf32>
      %319 = arith.mulf %50, %318 : vector<2x256xf32>
      %320 = arith.addf %310, %319 : vector<2x256xf32>
      %c47 = arith.constant 47 : index
      %c0_158 = arith.constant 0 : index
      %c0_159 = arith.constant 0 : index
      %321 = vector.load %arg2[%c47, %c0_158, %c0_159] : memref<49x2x1xf32, #tpu.memory_space<vmem>>, vector<1x2x1xf32>
      %322 = vector.shape_cast %321 : vector<1x2x1xf32> to vector<2x1xf32>
      %323 = vector.broadcast %322 : vector<2x1xf32> to vector<2x256xf32>
      %324 = arith.mulf %55, %323 : vector<2x256xf32>
      %325 = arith.addf %315, %324 : vector<2x256xf32>
      %326 = arith.addf %320, %325 : vector<2x256xf32>
      %c48 = arith.constant 48 : index
      %c0_160 = arith.constant 0 : index
      %c0_161 = arith.constant 0 : index
      %327 = vector.load %arg2[%c48, %c0_160, %c0_161] : memref<49x2x1xf32, #tpu.memory_space<vmem>>, vector<1x2x1xf32>
      %328 = vector.shape_cast %327 : vector<1x2x1xf32> to vector<2x1xf32>
      %329 = vector.broadcast %328 : vector<2x1xf32> to vector<2x256xf32>
      %330 = arith.mulf %60, %329 : vector<2x256xf32>
      %331 = arith.addf %326, %330 : vector<2x256xf32>
      %c208_i32 = arith.constant 208 : i32
      %332 = tpu.dynamic_rotate %331 by %c208_i32 dim 1 : vector<2x256xf32>, i32 -> vector<2x256xf32>
      %c6_162 = arith.constant 6 : index
      %c0_163 = arith.constant 0 : index
      %c0_164 = arith.constant 0 : index
      %333 = vector.load %arg4[%c6_162, %c0_163, %c0_164] : memref<7x1x256xf32, #tpu.memory_space<vmem>>, vector<1x1x256xf32>
      %334 = vector.shape_cast %333 : vector<1x1x256xf32> to vector<1x256xf32>
      %335 = vector.broadcast %334 : vector<1x256xf32> to vector<2x256xf32>
      %336 = arith.mulf %332, %335 : vector<2x256xf32>
      %337 = arith.addf %257, %336 : vector<2x256xf32>
      %338 = arith.addf %337, %297 : vector<2x256xf32>
      %339 = vector.extract_strided_slice %338 {offsets = [0, 0], sizes = [1, 256], strides = [1, 1]} : vector<2x256xf32> to vector<1x256xf32>
      %340 = vector.extract_strided_slice %338 {offsets = [1, 0], sizes = [1, 256], strides = [1, 1]} : vector<2x256xf32> to vector<1x256xf32>
      %341 = arith.addf %339, %340 : vector<1x256xf32>
      %c0_165 = arith.constant 0 : index
      %342 = memref.load %arg5[%c0_165] : memref<1xf32, #tpu.memory_space<smem>>
      %343 = vector.broadcast %342 : f32 to vector<1x256xf32>
      %344 = arith.addf %341, %343 : vector<1x256xf32>
      %cst = arith.constant 0.000000e+00 : f32
      %345 = vector.broadcast %cst : f32 to vector<1x256xf32>
      %346 = arith.subf %345, %344 : vector<1x256xf32>
      %347 = math.exp %346 : vector<1x256xf32>
      %cst_166 = arith.constant 1.000000e+00 : f32
      %348 = vector.broadcast %cst_166 : f32 to vector<1x256xf32>
      %349 = arith.addf %348, %347 : vector<1x256xf32>
      %cst_167 = arith.constant 1.000000e+00 : f32
      %350 = vector.broadcast %cst_167 : f32 to vector<1x256xf32>
      %351 = arith.divf %350, %349 : vector<1x256xf32>
      %352 = vector.shape_cast %351 : vector<1x256xf32> to vector<1x1x256xf32>
      %c0_168 = arith.constant 0 : index
      %c0_169 = arith.constant 0 : index
      %c0_170 = arith.constant 0 : index
      %353 = vector.load %arg7[%c0_168, %c0_169, %c0_170] : memref<1x1x256xf32, #tpu.memory_space<vmem>>, vector<1x1x256xf32>
      tpu.vector_store %arg7[%c0_168, %c0_169, %c0_170], %352 {strides = array<i32>} : memref<1x1x256xf32, #tpu.memory_space<vmem>>, vector<1x1x256xf32>,
    } else {
    }
    return
  }
  func.func @transform_0(%arg0: i32, %arg1: i32) -> (i32, i32, i32) {
    %c0_i32 = arith.constant 0 : i32
    %c0_i32_0 = arith.constant 0 : i32
    %c0_i32_1 = arith.constant 0 : i32
    %c0_i32_2 = arith.constant 0 : i32
    return %c0_i32, %c0_i32_0, %c0_i32_1 : i32, i32, i32
  }
  func.func @transform_1(%arg0: i32, %arg1: i32) -> (i32, i32, i32) {
    %c0_i32 = arith.constant 0 : i32
    %c0_i32_0 = arith.constant 0 : i32
    %c0_i32_1 = arith.constant 0 : i32
    %c0_i32_2 = arith.constant 0 : i32
    return %c0_i32, %c0_i32_0, %c0_i32_1 : i32, i32, i32
  }
  func.func @transform_2(%arg0: i32, %arg1: i32) -> (i32, i32, i32) {
    %c0_i32 = arith.constant 0 : i32
    %c0_i32_0 = arith.constant 0 : i32
    %c0_i32_1 = arith.constant 0 : i32
    %c0_i32_2 = arith.constant 0 : i32
    return %c0_i32, %c0_i32_0, %c0_i32_1 : i32, i32, i32
  }
  func.func @transform_3(%arg0: i32, %arg1: i32) -> i32 {
    %c0_i32 = arith.constant 0 : i32
    %c0_i32_0 = arith.constant 0 : i32
    return %c0_i32 : i32
  }
  func.func @transform_4(%arg0: i32, %arg1: i32) -> (i32, i32, i32) {
    %c0_i32 = arith.constant 0 : i32
    %c0_i32_0 = arith.constant 0 : i32
    return %arg0, %arg1, %c0_i32 : i32, i32, i32
  }
  func.func @transform_5(%arg0: i32, %arg1: i32) -> (i32, i32, i32) {
    %c0_i32 = arith.constant 0 : i32
    %c0_i32_0 = arith.constant 0 : i32
    %c0_i32_1 = arith.constant 0 : i32
    return %arg0, %c0_i32, %c0_i32_0 : i32, i32, i32
  }
}

</mosaic_0001>

<llo_original>
// kernel: tpu_custom_call.1
$region0: #{tpu_custom_call.1}
  #allocation0 [shape = 'u32[]', space=smem, size = 0x4, offset = 0x4, fixed_abs, tag = 'smem constant byte address 0x4 - core index']
  #allocation1 [shape = 'u32[144,128]{1,0:T(1,128)}', space=vmem, size = 0x12000, scoped, tag = 'internal scratch']
  #allocation2 [shape = 'f32[2,256]{1,0:T(2,128)}', space=vmem, size = 0x800, scoped, tag = 'scratch operand']
  #allocation3 [shape = 'f32[1]{0:T(128)S(6)}', space=smem, size = 0x200, scoped, tag = 'scoped memory for tpu_custom_call.1']
  %s0 = inlined_call_operand.vmem [shape: f32[49,2,1], index: 0, kind: input, shape index: {}]
  %s1 = inlined_call_operand.vmem [shape: f32[7,1,256], index: 1, kind: input, shape index: {}]
  %s2 = inlined_call_operand.vmem [shape: f32[7,1,256], index: 2, kind: input, shape index: {}]
  %s3 = inlined_call_operand.<no memory space> [shape: f32[1], index: 3, kind: input, shape index: {}]
  %s4 = inlined_call_operand.vmem [shape: f32[2,4,256], index: 4, kind: input, shape index: {}]
  %s5 = inlined_call_operand.hbm [shape: f32[2,1,256], index: 5, kind: output, shape index: {}]
  %s6 = sld [smem:[#allocation0]]
  $region61: #{tpu_custom_call.1} parent=0
    _
  %s8 = ssub.s32 1, %s6
  %s9 = scalar_select 0, %s8, %s6
  %10 = sst [smem:[#allocation3]] %s3
  $region1: #{tpu_custom_call.1} parent=0
    #allocation4 [shape = 'u8[2048]{0}', space=vmem, size = 0x800, scoped, tag = 'output window, operand 0']
    #allocation5 [shape = 's32[2]{0}', space=sflag, size = 0x8, scoped, tag = 'scoped memory for tpu_custom_call.1']
    %11 = vsyncpa [#allocation5], 0
    %s12 = scalar_lea.sflag [#allocation5], 1
    %13 = vsyncpa %s12, 0
    loop: start=0, step=1, limit=4
    $region2: #{tpu_custom_call.1} parent=1 // loop_pre_header
      _
    $region3: #{tpu_custom_call.1} parent=1 // loop_header
      %s15 = sphi 0, %s19
      %p16 = scmp.ge.s32.totalorder %s15, 4
      %s22 = sphi 0, %s34
      %s23 = sphi 0, %s30
      %s24 = sphi 0, %s22
      %s25 = sphi 0, %s23
      %s26 = sphi 0, %s24
      %s27 = sphi 0, %s25
      %s35 = sphi 0, %s35
      %s37 = sphi 0, %s35
      %s38 = sphi 0, %s37
      %s52 = sphi 0, %s38
      %s56 = sphi 0, %s56
      %s58 = sphi 0, %s56
      %s59 = sphi 0, %s58
      %s73 = sphi 0, %s59
      %s77 = sphi 0, %s77
      %s79 = sphi 0, %s77
      %s80 = sphi 0, %s79
      %s94 = sphi 0, %s80
      %s98 = sphi 0, %s98
      %s100 = sphi 0, %s98
      %s101 = sphi 0, %s100
      %s115 = sphi 0, %s101
      %s123 = sphi 0, %s125
      %s126 = sphi 0, %s123
      %s127 = sphi 0, %s126
      %s143 = sphi 0, %s127
      %s149 = sphi 0, %s151
      %s152 = sphi 0, %s149
      %s153 = sphi 0, %s152
      %s169 = sphi 0, %s153
    $region4: #{tpu_custom_call.1} parent=1 // loop_header_branch
      %18 = sbr.rel (%p16) target = $region8
    $region5: #{tpu_custom_call.1} parent=1 // loop_body
      %s20 = ssub.s32 %s15, 1
      %s21 = ssub.s32 %s15, 2
      %s28 = sadd.s32 1, %s23
      %p29 = scmp.ge.s32.totalorder %s28, 1
      %s30 = scalar_select %p29, 0, %s28
      %s31 = sadd.s32 1, %s22
      %s32 = scalar_select %p29, %s31, %s22
      %p33 = scmp.ge.s32.totalorder %s32, 2
      %s34 = scalar_select %p33, 0, %s32
      %s36 = sadd.s32 %s35, 1
      %p39 = scmp.eq.s32.totalorder %s15, 1
      %p40 = scmp.ne.s32.totalorder %s35, %s37
      %p41 = scmp.eq.s32.totalorder %s15, 0
      %p42 = por %p40, %p41
      %p43 = scmp.ne.s32.totalorder %s35, %s37
      %p44 = scmp.eq.s32.totalorder %s20, 1
      %p45 = por %p43, %p44
      %p46 = scmp.ne.s32.totalorder %s37, %s38
      %p47 = scmp.eq.s32.totalorder %s20, 0
      %p48 = por %p46, %p47
      %p49 = scmp.ne.s32.totalorder %s37, %s38
      %p50 = scmp.eq.s32.totalorder %s21, 1
      %p51 = por %p49, %p50
      %p53 = scmp.ne.s32.totalorder %s38, %s52
      %p54 = scmp.eq.s32.totalorder %s21, 0
      %p55 = por %p53, %p54
      %s57 = sadd.s32 %s56, 1
      %p60 = scmp.eq.s32.totalorder %s15, 1
      %p61 = scmp.ne.s32.totalorder %s56, %s58
      %p62 = scmp.eq.s32.totalorder %s15, 0
      %p63 = por %p61, %p62
      %p64 = scmp.ne.s32.totalorder %s56, %s58
      %p65 = scmp.eq.s32.totalorder %s20, 1
      %p66 = por %p64, %p65
      %p67 = scmp.ne.s32.totalorder %s58, %s59
      %p68 = scmp.eq.s32.totalorder %s20, 0
      %p69 = por %p67, %p68
      %p70 = scmp.ne.s32.totalorder %s58, %s59
      %p71 = scmp.eq.s32.totalorder %s21, 1
      %p72 = por %p70, %p71
      %p74 = scmp.ne.s32.totalorder %s59, %s73
      %p75 = scmp.eq.s32.totalorder %s21, 0
      %p76 = por %p74, %p75
      %s78 = sadd.s32 %s77, 1
      %p81 = scmp.eq.s32.totalorder %s15, 1
      %p82 = scmp.ne.s32.totalorder %s77, %s79
      %p83 = scmp.eq.s32.totalorder %s15, 0
      %p84 = por %p82, %p83
      %p85 = scmp.ne.s32.totalorder %s77, %s79
      %p86 = scmp.eq.s32.totalorder %s20, 1
      %p87 = por %p85, %p86
      %p88 = scmp.ne.s32.totalorder %s79, %s80
      %p89 = scmp.eq.s32.totalorder %s20, 0
      %p90 = por %p88, %p89
      %p91 = scmp.ne.s32.totalorder %s79, %s80
      %p92 = scmp.eq.s32.totalorder %s21, 1
      %p93 = por %p91, %p92
      %p95 = scmp.ne.s32.totalorder %s80, %s94
      %p96 = scmp.eq.s32.totalorder %s21, 0
      %p97 = por %p95, %p96
      %s99 = sadd.s32 %s98, 1
      %p102 = scmp.eq.s32.totalorder %s15, 1
      %p103 = scmp.ne.s32.totalorder %s98, %s100
      %p104 = scmp.eq.s32.totalorder %s15, 0
      %p105 = por %p103, %p104
      %p106 = scmp.ne.s32.totalorder %s98, %s100
      %p107 = scmp.eq.s32.totalorder %s20, 1
      %p108 = por %p106, %p107
      %p109 = scmp.ne.s32.totalorder %s100, %s101
      %p110 = scmp.eq.s32.totalorder %s20, 0
      %p111 = por %p109, %p110
      %p112 = scmp.ne.s32.totalorder %s100, %s101
      %p113 = scmp.eq.s32.totalorder %s21, 1
      %p114 = por %p112, %p113
      %p116 = scmp.ne.s32.totalorder %s101, %s115
      %p117 = scmp.eq.s32.totalorder %s21, 0
      %p118 = por %p116, %p117
      %s119 = ssub.s32 %s22, %s34
      %s120 = ssub.s32 %s23, %s30
      %s121 = sor.u32 %s119, %s120
      %p122 = scmp.eq.s32.totalorder %s121, 0
      %s124 = sadd.s32 %s123, 1
      %s125 = scalar_select %p122, %s123, %s124
      %p128 = pneg %p122
      %p129 = scmp.eq.s32.totalorder %s15, 1
      %p130 = por %p128, %p129
      %p131 = scmp.ne.s32.totalorder %s123, %s126
      %p132 = scmp.eq.s32.totalorder %s15, 0
      %p133 = por %p131, %p132
      %p134 = scmp.ne.s32.totalorder %s123, %s126
      %p135 = scmp.eq.s32.totalorder %s20, 1
      %p136 = por %p134, %p135
      %p137 = scmp.ne.s32.totalorder %s126, %s127
      %p138 = scmp.eq.s32.totalorder %s20, 0
      %p139 = por %p137, %p138
      %p140 = scmp.ne.s32.totalorder %s126, %s127
      %p141 = scmp.eq.s32.totalorder %s21, 1
      %p142 = por %p140, %p141
      %p144 = scmp.ne.s32.totalorder %s127, %s143
      %p145 = scmp.eq.s32.totalorder %s21, 0
      %p146 = por %p144, %p145
      %s147 = ssub.s32 %s22, %s34
      %p148 = scmp.eq.s32.totalorder %s147, 0
      %s150 = sadd.s32 %s149, 1
      %s151 = scalar_select %p148, %s149, %s150
      %p154 = pneg %p148
      %p155 = scmp.eq.s32.totalorder %s15, 1
      %p156 = por %p154, %p155
      %p157 = scmp.ne.s32.totalorder %s149, %s152
      %p158 = scmp.eq.s32.totalorder %s15, 0
      %p159 = por %p157, %p158
      %p160 = scmp.ne.s32.totalorder %s149, %s152
      %p161 = scmp.eq.s32.totalorder %s20, 1
      %p162 = por %p160, %p161
      %p163 = scmp.ne.s32.totalorder %s152, %s153
      %p164 = scmp.eq.s32.totalorder %s20, 0
      %p165 = por %p163, %p164
      %p166 = scmp.ne.s32.totalorder %s152, %s153
      %p167 = scmp.eq.s32.totalorder %s21, 1
      %p168 = por %p166, %p167
      %p170 = scmp.ne.s32.totalorder %s153, %s169
      %p171 = scmp.eq.s32.totalorder %s21, 0
      %p172 = por %p170, %p171
      %p173 = scmp.le.s32.totalorder 1, %s15
      %p174 = scmp.lt.s32.totalorder %s15, 3
      %p175 = pnand %p173, %p174
      %p176 = pneg %p175
      // Predicated region
      $region9: #{tpu_custom_call.1} parent=5 // pred_check
        _
      $region10: #{tpu_custom_call.1} parent=5 // pred_check_branch
        %178 = sbr.rel (%p175) target = $region12
      $region11: #{tpu_custom_call.1} parent=5 // pred_region
        %s179 = ssub.s32 %s15, 1
        // Predicated region
        $region13: #{tpu_custom_call.1} parent=11 // pred_check
          %p180 = pneg %p48
        $region14: #{tpu_custom_call.1} parent=11 // pred_check_branch
          %182 = sbr.rel (%p180) target = $region16
        $region15: #{tpu_custom_call.1} parent=11 // pred_region
          _
        $region16: #{tpu_custom_call.1} parent=11 // pred_fallthru
          _
        // Predicated region
        $region17: #{tpu_custom_call.1} parent=11 // pred_check
          %p183 = pneg %p69
        $region18: #{tpu_custom_call.1} parent=11 // pred_check_branch
          %185 = sbr.rel (%p183) target = $region20
        $region19: #{tpu_custom_call.1} parent=11 // pred_region
          _
        $region20: #{tpu_custom_call.1} parent=11 // pred_fallthru
          _
        // Predicated region
        $region21: #{tpu_custom_call.1} parent=11 // pred_check
          %p186 = pneg %p90
        $region22: #{tpu_custom_call.1} parent=11 // pred_check_branch
          %188 = sbr.rel (%p186) target = $region24
        $region23: #{tpu_custom_call.1} parent=11 // pred_region
          _
        $region24: #{tpu_custom_call.1} parent=11 // pred_fallthru
          _
        // Predicated region
        $region25: #{tpu_custom_call.1} parent=11 // pred_check
          %p189 = pneg %p111
        $region26: #{tpu_custom_call.1} parent=11 // pred_check_branch
          %191 = sbr.rel (%p189) target = $region28
        $region27: #{tpu_custom_call.1} parent=11 // pred_region
          _
        $region28: #{tpu_custom_call.1} parent=11 // pred_fallthru
          _
      $region12: #{tpu_custom_call.1} parent=5 // pred_fallthru
        _
      %p192 = scmp.lt.s32.totalorder %s15, 2
      // Predicated region
      $region29: #{tpu_custom_call.1} parent=5 // pred_check
        %p193 = pneg %p192
      $region30: #{tpu_custom_call.1} parent=5 // pred_check_branch
        %195 = sbr.rel (%p193) target = $region32
      $region31: #{tpu_custom_call.1} parent=5 // pred_region
        // Predicated region
        $region33: #{tpu_custom_call.1} parent=31 // pred_check
          %p196 = pneg %p133
        $region34: #{tpu_custom_call.1} parent=31 // pred_check_branch
          %198 = sbr.rel (%p196) target = $region36
        $region35: #{tpu_custom_call.1} parent=31 // pred_region
          %p199 = scmp.lt.s32.totalorder %s22, 1
          %s200 = scalar_select %p199, %s22, 1
          %p201 = scmp.lt.s32.totalorder %s23, 0
          %s202 = scalar_select %p201, %s23, 0
          %s203 = smul.addr %s202, 2
          %s204 = smul.addr %s200, 2
          %s205 = sadd.s32 %s203, %s204
          %s206 = smul.addr %s205, 4
          %s207 = scalar_lea.vmem %s4, %s206
        $region36: #{tpu_custom_call.1} parent=31 // pred_fallthru
          _
      $region32: #{tpu_custom_call.1} parent=5 // pred_fallthru
        _
      %p208 = scmp.le.s32.totalorder 1, %s15
      %p209 = scmp.lt.s32.totalorder %s15, 3
      %p210 = pnand %p208, %p209
      %p211 = pneg %p210
      // Predicated region
      $region37: #{tpu_custom_call.1} parent=5 // pred_check
        _
      $region38: #{tpu_custom_call.1} parent=5 // pred_check_branch
        %213 = sbr.rel (%p210) target = $region40
      $region39: #{tpu_custom_call.1} parent=5 // pred_region
        %s214 = ssub.s32 %s15, 1
        %p215 = pneg %p48
        %p216 = pneg %p45
        %p217 = pneg %p69
        %p218 = pneg %p66
        %p219 = pneg %p90
        %p220 = pneg %p87
        %p221 = pneg %p111
        %p222 = pneg %p108
        %p223 = scmp.lt.s32.totalorder %s24, 1
        %s224 = scalar_select %p223, %s24, 1
        %p225 = scmp.lt.s32.totalorder %s25, 0
        %s226 = scalar_select %p225, %s25, 0
        %s227 = smul.addr %s226, 2
        %s228 = smul.addr %s224, 2
        %s229 = sadd.s32 %s227, %s228
        %s230 = smul.addr %s229, 4
        %s231 = scalar_lea.vmem %s4, %s230
        %p232 = pneg %p139
        %p233 = pneg %p136
        %p234 = pneg %p165
        %p235 = pneg %p162
        %s236 = sand.u32 %s152, 1
        %s237 = scalar_lea.sflag [#allocation5], %s236
        %s238 = sand.u32 %s152, 1
        %s239 = smul.addr %s238, 2
        %s240 = scalar_lea.vmem [#allocation4], %s239
        %p241 = scmp.lt.s32.totalorder %s24, 1
        %s242 = scalar_select %p241, %s24, 1
        %p243 = scmp.lt.s32.totalorder %s25, 0
        %s244 = scalar_select %p243, %s25, 0
        %s245 = smul.addr %s244, 2
        %s246 = smul.addr %s242, 2
        %s247 = sadd.s32 %s245, %s246
        %s248 = smul.addr %s247, 4
        %s249 = scalar_lea.vmem %s4, %s248
        %p250 = scmp.eq.s32.totalorder %s25, 0
        // Predicated region
        $region41: #{tpu_custom_call.1} parent=39 // pred_check
          %p251 = pneg %p250
        $region42: #{tpu_custom_call.1} parent=39 // pred_check_branch
          %253 = sbr.rel (%p251) target = $region44
        $region43: #{tpu_custom_call.1} parent=39 // pred_region
          %v254 = vlaneseq
          %vm255 = vcmp.ge.s32.totalorder %v254, 0
          %vm256 = vcmp.lt.s32.totalorder %v254, 256
          %vm257 = vmand %vm255, %vm256
          %258 = vst.msk [vmem:[#allocation2] ss:$2 sm:$0x3] %vm257, 0.0
          %s259 = scalar_lea.vmem [#allocation2], 1
          %260 = vst.msk [vmem:[%s259] ss:$2 sm:$0x3] %vm257, -inf
        $region44: #{tpu_custom_call.1} parent=39 // pred_fallthru
          _
        %v261 = vld [vmem:[#allocation2] ss:$2 sm:$0x3]
        %s262 = scalar_lea.vmem [#allocation2], 1
        %v263 = vld [vmem:[%s262] ss:$2 sm:$0x3]
        %v264 = vld [vmem:[%s249] ss:$4 sm:$0x3]
        %v265 = vadd.f32 %v261, %v264
        %v266 = vmax.f32 %v263, %v264
        %s267 = scalar_lea.vmem %s249, 1
        %v268 = vld [vmem:[%s267] ss:$4 sm:$0x3]
        %v269 = vadd.f32 %v265, %v268
        %v270 = vmax.f32 %v266, %v268
        %s271 = scalar_lea.vmem %s249, 2
        %v272 = vld [vmem:[%s271] ss:$4 sm:$0x3]
        %v273 = vadd.f32 %v269, %v272
        %v274 = vmax.f32 %v270, %v272
        %s275 = scalar_lea.vmem %s249, 3
        %v276 = vld [vmem:[%s275] ss:$4 sm:$0x3]
        %v277 = vadd.f32 %v273, %v276
        %v278 = vmax.f32 %v274, %v276
        %v279 = vlaneseq
        %vm280 = vcmp.ge.s32.totalorder %v279, 0
        %vm281 = vcmp.lt.s32.totalorder %v279, 256
        %vm282 = vmand %vm280, %vm281
        %283 = vst.msk [vmem:[#allocation2] ss:$2 sm:$0x3] %vm282, %v277
        %284 = vst.msk [vmem:[%s262] ss:$2 sm:$0x3] %vm282, %v278
        // Predicated region
        $region45: #{tpu_custom_call.1} parent=39 // pred_check
          %p285 = pneg %p250
        $region46: #{tpu_custom_call.1} parent=39 // pred_check_branch
          %287 = sbr.rel (%p285) target = $region48
        $region47: #{tpu_custom_call.1} parent=39 // pred_region
          %v288 = vld [vmem:[#allocation2] sm:$0xf]
          %v291 = vunpack.c.l.s4 1983009808
          %v292 = vunpack.c.0.s8 %v291
          %v293 = vlaneseq
          %v294 = vshrl.u32 %v293, 7
          %v295 = vsub.s32 %v292, %v294
          %v296 = vrot.slane %v288, %v295
          %v297 = vcombine.high %v296, %v296
          %300 = vrot.lane.b32.xlu0 %v296, 3
          %v301 = vpop.permute.xlu0 %300
          %302 = vrot.lane.b32.xlu0 %v297, 3
          %v303 = vpop.permute.xlu0 %302
          %v304 = vlaneseq
          %v305 = vand.u32 %v304, 127
          %vm306 = vcmp.lt.s32.totalorder %v305, 3
          %v307 = vsel %vm306, %v301, %v303
          %v308 = vsel %vm306, %v303, %v301
          %v309 = vld [vmem:[%s1] sm:$0x3]
          %v311 = vlaneseq
          %v312 = vshrl.u32 %v311, 7
          %v313 = vsub.s32 0, %v312
          %v314 = vrot.slane %v309, %v313
          %v315 = vlaneseq
          %v316 = vshrl.u32 %v315, 7
          %v317 = vsub.s32 1, %v316
          %v318 = vrot.slane %v309, %v317
          %v321 = vmul.f32 %v308, %v314
          %v322 = vmul.f32 %v307, %v318
          %323 = vrot.lane.b32.xlu0 %v296, 2
          %v324 = vpop.permute.xlu0 %323
          %325 = vrot.lane.b32.xlu0 %v297, 2
          %v326 = vpop.permute.xlu0 %325
          %vm327 = vcmp.lt.s32.totalorder %v305, 2
          %v328 = vsel %vm327, %v324, %v326
          %v329 = vsel %vm327, %v326, %v324
          %s330 = scalar_lea.vmem %s1, 2
          %v331 = vld [vmem:[%s330] sm:$0x3]
          %v333 = vlaneseq
          %v334 = vshrl.u32 %v333, 7
          %v335 = vsub.s32 0, %v334
          %v336 = vrot.slane %v331, %v335
          %v337 = vlaneseq
          %v338 = vshrl.u32 %v337, 7
          %v339 = vsub.s32 1, %v338
          %v340 = vrot.slane %v331, %v339
          %v343 = vmul.f32 %v329, %v336
          %v344 = vmul.f32 %v328, %v340
          %345 = vrot.lane.b32.xlu0 %v296, 1
          %v346 = vpop.permute.xlu0 %345
          %347 = vrot.lane.b32.xlu0 %v297, 1
          %v348 = vpop.permute.xlu0 %347
          %vm349 = vcmp.lt.s32.totalorder %v305, 1
          %v350 = vsel %vm349, %v346, %v348
          %v351 = vsel %vm349, %v348, %v346
          %s352 = scalar_lea.vmem %s1, 4
          %v353 = vld [vmem:[%s352] sm:$0x3]
          %v355 = vlaneseq
          %v356 = vshrl.u32 %v355, 7
          %v357 = vsub.s32 0, %v356
          %v358 = vrot.slane %v353, %v357
          %v359 = vlaneseq
          %v360 = vshrl.u32 %v359, 7
          %v361 = vsub.s32 1, %v360
          %v362 = vrot.slane %v353, %v361
          %v365 = vmul.f32 %v351, %v358
          %v366 = vmul.f32 %v350, %v362
          %s367 = scalar_lea.vmem %s1, 6
          %v368 = vld [vmem:[%s367] sm:$0x3]
          %v370 = vlaneseq
          %v371 = vshrl.u32 %v370, 7
          %v372 = vsub.s32 0, %v371
          %v373 = vrot.slane %v368, %v372
          %v374 = vlaneseq
          %v375 = vshrl.u32 %v374, 7
          %v376 = vsub.s32 1, %v375
          %v377 = vrot.slane %v368, %v376
          %v378 = vcombine.low %v373, %v377
          %v380 = vunpack.c.l.s4 1983009808
          %v381 = vunpack.c.0.s8 %v380
          %v382 = vlaneseq
          %v383 = vshrl.u32 %v382, 7
          %v384 = vsub.s32 %v381, %v383
          %v385 = vrot.slane %v378, %v384
          %v387 = vmul.f32 %v288, %v385
          %388 = vrot.lane.b32.xlu0 %v296, 127
          %v389 = vpop.permute.xlu0 %388
          %390 = vrot.lane.b32.xlu0 %v297, 127
          %v391 = vpop.permute.xlu0 %390
          %vm392 = vcmp.lt.s32.totalorder %v305, 127
          %v393 = vsel %vm392, %v389, %v391
          %v394 = vsel %vm392, %v391, %v389
          %s395 = scalar_lea.vmem %s1, 8
          %v396 = vld [vmem:[%s395] sm:$0x3]
          %v398 = vlaneseq
          %v399 = vshrl.u32 %v398, 7
          %v400 = vsub.s32 0, %v399
          %v401 = vrot.slane %v396, %v400
          %v402 = vlaneseq
          %v403 = vshrl.u32 %v402, 7
          %v404 = vsub.s32 1, %v403
          %v405 = vrot.slane %v396, %v404
          %v408 = vmul.f32 %v393, %v401
          %v409 = vmul.f32 %v394, %v405
          %410 = vrot.lane.b32.xlu0 %v296, 126
          %v411 = vpop.permute.xlu0 %410
          %412 = vrot.lane.b32.xlu0 %v297, 126
          %v413 = vpop.permute.xlu0 %412
          %vm414 = vcmp.lt.s32.totalorder %v305, 126
          %v415 = vsel %vm414, %v411, %v413
          %v416 = vsel %vm414, %v413, %v411
          %s417 = scalar_lea.vmem %s1, 10
          %v418 = vld [vmem:[%s417] sm:$0x3]
          %v420 = vlaneseq
          %v421 = vshrl.u32 %v420, 7
          %v422 = vsub.s32 0, %v421
          %v423 = vrot.slane %v418, %v422
          %v424 = vlaneseq
          %v425 = vshrl.u32 %v424, 7
          %v426 = vsub.s32 1, %v425
          %v427 = vrot.slane %v418, %v426
          %v430 = vmul.f32 %v415, %v423
          %v431 = vmul.f32 %v416, %v427
          %432 = vrot.lane.b32.xlu0 %v296, 125
          %v433 = vpop.permute.xlu0 %432
          %434 = vrot.lane.b32.xlu0 %v297, 125
          %v435 = vpop.permute.xlu0 %434
          %vm436 = vcmp.lt.s32.totalorder %v305, 125
          %v437 = vsel %vm436, %v433, %v435
          %v438 = vsel %vm436, %v435, %v433
          %s439 = scalar_lea.vmem %s1, 12
          %v440 = vld [vmem:[%s439] sm:$0x3]
          %v442 = vlaneseq
          %v443 = vshrl.u32 %v442, 7
          %v444 = vsub.s32 0, %v443
          %v445 = vrot.slane %v440, %v444
          %v446 = vlaneseq
          %v447 = vshrl.u32 %v446, 7
          %v448 = vsub.s32 1, %v447
          %v449 = vrot.slane %v440, %v448
          %v452 = vmul.f32 %v437, %v445
          %v453 = vmul.f32 %v438, %v449
          %v454 = vld [vmem:[%s0] sm:$0x3]
          %456 = vset.pattern.permute.xlu0 0
          %457 = vperm.xlu0 %456, %v454
          %v458 = vpop.permute.xlu0 %457
          %v460 = vmul.f32 %v321, %v458
          %v461 = vmul.f32 %v322, %v458
          %s462 = scalar_lea.vmem %s0, 2
          %v463 = vld [vmem:[%s462] sm:$0x3]
          %465 = vset.pattern.permute.xlu0 0
          %466 = vperm.xlu0 %465, %v463
          %v467 = vpop.permute.xlu0 %466
          %v469 = vmul.f32 %v343, %v467
          %v470 = vmul.f32 %v344, %v467
          %s471 = scalar_lea.vmem %s0, 4
          %v472 = vld [vmem:[%s471] sm:$0x3]
          %474 = vset.pattern.permute.xlu0 0
          %475 = vperm.xlu0 %474, %v472
          %v476 = vpop.permute.xlu0 %475
          %v478 = vmul.f32 %v365, %v476
          %v479 = vmul.f32 %v366, %v476
          %v480 = vadd.f32 %v460, %v478
          %v481 = vadd.f32 %v461, %v479
          %s482 = scalar_lea.vmem %s0, 6
          %v483 = vld [vmem:[%s482] sm:$0x3]
          %485 = vset.pattern.permute.xlu0 0
          %486 = vperm.xlu0 %485, %v483
          %v487 = vpop.permute.xlu0 %486
          %v489 = vunpack.c.l.s4 269488144
          %v490 = vunpack.c.0.s8 %v489
          %v491 = vlaneseq
          %v492 = vshrl.u32 %v491, 7
          %v493 = vsub.s32 %v490, %v492
          %v494 = vrot.slane %v487, %v493
          %v496 = vmul.f32 %v387, %v494
          %v499 = vunpack.c.l.s4 1983009808
          %v500 = vunpack.c.0.s8 %v499
          %v501 = vlaneseq
          %v502 = vshrl.u32 %v501, 7
          %v503 = vsub.s32 %v500, %v502
          %v504 = vrot.slane %v496, %v503
          %v505 = vcombine.high %v504, %v504
          %v508 = vadd.f32 %v469, %v504
          %v509 = vadd.f32 %v470, %v505
          %s510 = scalar_lea.vmem %s0, 8
          %v511 = vld [vmem:[%s510] sm:$0x3]
          %513 = vset.pattern.permute.xlu0 0
          %514 = vperm.xlu0 %513, %v511
          %v515 = vpop.permute.xlu0 %514
          %v517 = vmul.f32 %v408, %v515
          %v518 = vmul.f32 %v409, %v515
          %v519 = vadd.f32 %v480, %v517
          %v520 = vadd.f32 %v481, %v518
          %s521 = scalar_lea.vmem %s0, 10
          %v522 = vld [vmem:[%s521] sm:$0x3]
          %524 = vset.pattern.permute.xlu0 0
          %525 = vperm.xlu0 %524, %v522
          %v526 = vpop.permute.xlu0 %525
          %v528 = vmul.f32 %v430, %v526
          %v529 = vmul.f32 %v431, %v526
          %v530 = vadd.f32 %v508, %v528
          %v531 = vadd.f32 %v509, %v529
          %v532 = vadd.f32 %v519, %v530
          %v533 = vadd.f32 %v520, %v531
          %s534 = scalar_lea.vmem %s0, 12
          %v535 = vld [vmem:[%s534] sm:$0x3]
          %537 = vset.pattern.permute.xlu0 0
          %538 = vperm.xlu0 %537, %v535
          %v539 = vpop.permute.xlu0 %538
          %v541 = vmul.f32 %v452, %v539
          %v542 = vmul.f32 %v453, %v539
          %v543 = vadd.f32 %v532, %v541
          %v544 = vadd.f32 %v533, %v542
          %545 = vrot.lane.b32.xlu0 %v543, 48
          %v546 = vpop.permute.xlu0 %545
          %547 = vrot.lane.b32.xlu0 %v544, 48
          %v548 = vpop.permute.xlu0 %547
          %vm549 = vcmp.lt.s32.totalorder %v305, 48
          %v550 = vsel %vm549, %v546, %v548
          %v551 = vsel %vm549, %v548, %v546
          %v552 = vld [vmem:[%s2] sm:$0x3]
          %v554 = vlaneseq
          %v555 = vshrl.u32 %v554, 7
          %v556 = vsub.s32 0, %v555
          %v557 = vrot.slane %v552, %v556
          %v558 = vlaneseq
          %v559 = vshrl.u32 %v558, 7
          %v560 = vsub.s32 1, %v559
          %v561 = vrot.slane %v552, %v560
          %v564 = vmul.f32 %v551, %v557
          %v565 = vmul.f32 %v550, %v561
          %s566 = scalar_lea.vmem %s0, 14
          %v567 = vld [vmem:[%s566] sm:$0x3]
          %569 = vset.pattern.permute.xlu0 0
          %570 = vperm.xlu0 %569, %v567
          %v571 = vpop.permute.xlu0 %570
          %v573 = vmul.f32 %v321, %v571
          %v574 = vmul.f32 %v322, %v571
          %s575 = scalar_lea.vmem %s0, 16
          %v576 = vld [vmem:[%s575] sm:$0x3]
          %578 = vset.pattern.permute.xlu0 0
          %579 = vperm.xlu0 %578, %v576
          %v580 = vpop.permute.xlu0 %579
          %v582 = vmul.f32 %v343, %v580
          %v583 = vmul.f32 %v344, %v580
          %s584 = scalar_lea.vmem %s0, 18
          %v585 = vld [vmem:[%s584] sm:$0x3]
          %587 = vset.pattern.permute.xlu0 0
          %588 = vperm.xlu0 %587, %v585
          %v589 = vpop.permute.xlu0 %588
          %v591 = vmul.f32 %v365, %v589
          %v592 = vmul.f32 %v366, %v589
          %v593 = vadd.f32 %v573, %v591
          %v594 = vadd.f32 %v574, %v592
          %s595 = scalar_lea.vmem %s0, 20
          %v596 = vld [vmem:[%s595] sm:$0x3]
          %598 = vset.pattern.permute.xlu0 0
          %599 = vperm.xlu0 %598, %v596
          %v600 = vpop.permute.xlu0 %599
          %v602 = vunpack.c.l.s4 269488144
          %v603 = vunpack.c.0.s8 %v602
          %v604 = vlaneseq
          %v605 = vshrl.u32 %v604, 7
          %v606 = vsub.s32 %v603, %v605
          %v607 = vrot.slane %v600, %v606
          %v609 = vmul.f32 %v387, %v607
          %v612 = vunpack.c.l.s4 1983009808
          %v613 = vunpack.c.0.s8 %v612
          %v614 = vlaneseq
          %v615 = vshrl.u32 %v614, 7
          %v616 = vsub.s32 %v613, %v615
          %v617 = vrot.slane %v609, %v616
          %v618 = vcombine.high %v617, %v617
          %v621 = vadd.f32 %v582, %v617
          %v622 = vadd.f32 %v583, %v618
          %s623 = scalar_lea.vmem %s0, 22
          %v624 = vld [vmem:[%s623] sm:$0x3]
          %626 = vset.pattern.permute.xlu0 0
          %627 = vperm.xlu0 %626, %v624
          %v628 = vpop.permute.xlu0 %627
          %v630 = vmul.f32 %v408, %v628
          %v631 = vmul.f32 %v409, %v628
          %v632 = vadd.f32 %v593, %v630
          %v633 = vadd.f32 %v594, %v631
          %s634 = scalar_lea.vmem %s0, 24
          %v635 = vld [vmem:[%s634] sm:$0x3]
          %637 = vset.pattern.permute.xlu0 0
          %638 = vperm.xlu0 %637, %v635
          %v639 = vpop.permute.xlu0 %638
          %v641 = vmul.f32 %v430, %v639
          %v642 = vmul.f32 %v431, %v639
          %v643 = vadd.f32 %v621, %v641
          %v644 = vadd.f32 %v622, %v642
          %v645 = vadd.f32 %v632, %v643
          %v646 = vadd.f32 %v633, %v644
          %s647 = scalar_lea.vmem %s0, 26
          %v648 = vld [vmem:[%s647] sm:$0x3]
          %650 = vset.pattern.permute.xlu0 0
          %651 = vperm.xlu0 %650, %v648
          %v652 = vpop.permute.xlu0 %651
          %v654 = vmul.f32 %v452, %v652
          %v655 = vmul.f32 %v453, %v652
          %v656 = vadd.f32 %v645, %v654
          %v657 = vadd.f32 %v646, %v655
          %658 = vrot.lane.b32.xlu0 %v656, 32
          %v659 = vpop.permute.xlu0 %658
          %660 = vrot.lane.b32.xlu0 %v657, 32
          %v661 = vpop.permute.xlu0 %660
          %vm662 = vcmp.lt.s32.totalorder %v305, 32
          %v663 = vsel %vm662, %v659, %v661
          %v664 = vsel %vm662, %v661, %v659
          %s665 = scalar_lea.vmem %s2, 2
          %v666 = vld [vmem:[%s665] sm:$0x3]
          %v668 = vlaneseq
          %v669 = vshrl.u32 %v668, 7
          %v670 = vsub.s32 0, %v669
          %v671 = vrot.slane %v666, %v670
          %v672 = vlaneseq
          %v673 = vshrl.u32 %v672, 7
          %v674 = vsub.s32 1, %v673
          %v675 = vrot.slane %v666, %v674
          %v678 = vmul.f32 %v664, %v671
          %v679 = vmul.f32 %v663, %v675
          %s680 = scalar_lea.vmem %s0, 28
          %v681 = vld [vmem:[%s680] sm:$0x3]
          %683 = vset.pattern.permute.xlu0 0
          %684 = vperm.xlu0 %683, %v681
          %v685 = vpop.permute.xlu0 %684
          %v687 = vmul.f32 %v321, %v685
          %v688 = vmul.f32 %v322, %v685
          %s689 = scalar_lea.vmem %s0, 30
          %v690 = vld [vmem:[%s689] sm:$0x3]
          %692 = vset.pattern.permute.xlu0 0
          %693 = vperm.xlu0 %692, %v690
          %v694 = vpop.permute.xlu0 %693
          %v696 = vmul.f32 %v343, %v694
          %v697 = vmul.f32 %v344, %v694
          %s698 = scalar_lea.vmem %s0, 32
          %v699 = vld [vmem:[%s698] sm:$0x3]
          %701 = vset.pattern.permute.xlu0 0
          %702 = vperm.xlu0 %701, %v699
          %v703 = vpop.permute.xlu0 %702
          %v705 = vmul.f32 %v365, %v703
          %v706 = vmul.f32 %v366, %v703
          %v707 = vadd.f32 %v687, %v705
          %v708 = vadd.f32 %v688, %v706
          %s709 = scalar_lea.vmem %s0, 34
          %v710 = vld [vmem:[%s709] sm:$0x3]
          %712 = vset.pattern.permute.xlu0 0
          %713 = vperm.xlu0 %712, %v710
          %v714 = vpop.permute.xlu0 %713
          %v716 = vunpack.c.l.s4 269488144
          %v717 = vunpack.c.0.s8 %v716
          %v718 = vlaneseq
          %v719 = vshrl.u32 %v718, 7
          %v720 = vsub.s32 %v717, %v719
          %v721 = vrot.slane %v714, %v720
          %v723 = vmul.f32 %v387, %v721
          %v726 = vunpack.c.l.s4 1983009808
          %v727 = vunpack.c.0.s8 %v726
          %v728 = vlaneseq
          %v729 = vshrl.u32 %v728, 7
          %v730 = vsub.s32 %v727, %v729
          %v731 = vrot.slane %v723, %v730
          %v732 = vcombine.high %v731, %v731
          %v735 = vadd.f32 %v696, %v731
          %v736 = vadd.f32 %v697, %v732
          %s737 = scalar_lea.vmem %s0, 36
          %v738 = vld [vmem:[%s737] sm:$0x3]
          %740 = vset.pattern.permute.xlu0 0
          %741 = vperm.xlu0 %740, %v738
          %v742 = vpop.permute.xlu0 %741
          %v744 = vmul.f32 %v408, %v742
          %v745 = vmul.f32 %v409, %v742
          %v746 = vadd.f32 %v707, %v744
          %v747 = vadd.f32 %v708, %v745
          %s748 = scalar_lea.vmem %s0, 38
          %v749 = vld [vmem:[%s748] sm:$0x3]
          %751 = vset.pattern.permute.xlu0 0
          %752 = vperm.xlu0 %751, %v749
          %v753 = vpop.permute.xlu0 %752
          %v755 = vmul.f32 %v430, %v753
          %v756 = vmul.f32 %v431, %v753
          %v757 = vadd.f32 %v735, %v755
          %v758 = vadd.f32 %v736, %v756
          %v759 = vadd.f32 %v746, %v757
          %v760 = vadd.f32 %v747, %v758
          %s761 = scalar_lea.vmem %s0, 40
          %v762 = vld [vmem:[%s761] sm:$0x3]
          %764 = vset.pattern.permute.xlu0 0
          %765 = vperm.xlu0 %764, %v762
          %v766 = vpop.permute.xlu0 %765
          %v768 = vmul.f32 %v452, %v766
          %v769 = vmul.f32 %v453, %v766
          %v770 = vadd.f32 %v759, %v768
          %v771 = vadd.f32 %v760, %v769
          %772 = vrot.lane.b32.xlu0 %v770, 16
          %v773 = vpop.permute.xlu0 %772
          %774 = vrot.lane.b32.xlu0 %v771, 16
          %v775 = vpop.permute.xlu0 %774
          %vm776 = vcmp.lt.s32.totalorder %v305, 16
          %v777 = vsel %vm776, %v773, %v775
          %v778 = vsel %vm776, %v775, %v773
          %s779 = scalar_lea.vmem %s2, 4
          %v780 = vld [vmem:[%s779] sm:$0x3]
          %v782 = vlaneseq
          %v783 = vshrl.u32 %v782, 7
          %v784 = vsub.s32 0, %v783
          %v785 = vrot.slane %v780, %v784
          %v786 = vlaneseq
          %v787 = vshrl.u32 %v786, 7
          %v788 = vsub.s32 1, %v787
          %v789 = vrot.slane %v780, %v788
          %v792 = vmul.f32 %v778, %v785
          %v793 = vmul.f32 %v777, %v789
          %v794 = vadd.f32 %v564, %v792
          %v795 = vadd.f32 %v565, %v793
          %s796 = scalar_lea.vmem %s0, 42
          %v797 = vld [vmem:[%s796] sm:$0x3]
          %799 = vset.pattern.permute.xlu0 0
          %800 = vperm.xlu0 %799, %v797
          %v801 = vpop.permute.xlu0 %800
          %v803 = vmul.f32 %v321, %v801
          %v804 = vmul.f32 %v322, %v801
          %s805 = scalar_lea.vmem %s0, 44
          %v806 = vld [vmem:[%s805] sm:$0x3]
          %808 = vset.pattern.permute.xlu0 0
          %809 = vperm.xlu0 %808, %v806
          %v810 = vpop.permute.xlu0 %809
          %v812 = vmul.f32 %v343, %v810
          %v813 = vmul.f32 %v344, %v810
          %s814 = scalar_lea.vmem %s0, 46
          %v815 = vld [vmem:[%s814] sm:$0x3]
          %817 = vset.pattern.permute.xlu0 0
          %818 = vperm.xlu0 %817, %v815
          %v819 = vpop.permute.xlu0 %818
          %v821 = vmul.f32 %v365, %v819
          %v822 = vmul.f32 %v366, %v819
          %v823 = vadd.f32 %v803, %v821
          %v824 = vadd.f32 %v804, %v822
          %s825 = scalar_lea.vmem %s0, 48
          %v826 = vld [vmem:[%s825] sm:$0x3]
          %828 = vset.pattern.permute.xlu0 0
          %829 = vperm.xlu0 %828, %v826
          %v830 = vpop.permute.xlu0 %829
          %v832 = vunpack.c.l.s4 269488144
          %v833 = vunpack.c.0.s8 %v832
          %v834 = vlaneseq
          %v835 = vshrl.u32 %v834, 7
          %v836 = vsub.s32 %v833, %v835
          %v837 = vrot.slane %v830, %v836
          %v839 = vmul.f32 %v387, %v837
          %v842 = vunpack.c.l.s4 1983009808
          %v843 = vunpack.c.0.s8 %v842
          %v844 = vlaneseq
          %v845 = vshrl.u32 %v844, 7
          %v846 = vsub.s32 %v843, %v845
          %v847 = vrot.slane %v839, %v846
          %v848 = vcombine.high %v847, %v847
          %v851 = vadd.f32 %v812, %v847
          %v852 = vadd.f32 %v813, %v848
          %s853 = scalar_lea.vmem %s0, 50
          %v854 = vld [vmem:[%s853] sm:$0x3]
          %856 = vset.pattern.permute.xlu0 0
          %857 = vperm.xlu0 %856, %v854
          %v858 = vpop.permute.xlu0 %857
          %v860 = vmul.f32 %v408, %v858
          %v861 = vmul.f32 %v409, %v858
          %v862 = vadd.f32 %v823, %v860
          %v863 = vadd.f32 %v824, %v861
          %s864 = scalar_lea.vmem %s0, 52
          %v865 = vld [vmem:[%s864] sm:$0x3]
          %867 = vset.pattern.permute.xlu0 0
          %868 = vperm.xlu0 %867, %v865
          %v869 = vpop.permute.xlu0 %868
          %v871 = vmul.f32 %v430, %v869
          %v872 = vmul.f32 %v431, %v869
          %v873 = vadd.f32 %v851, %v871
          %v874 = vadd.f32 %v852, %v872
          %v875 = vadd.f32 %v862, %v873
          %v876 = vadd.f32 %v863, %v874
          %s877 = scalar_lea.vmem %s0, 54
          %v878 = vld [vmem:[%s877] sm:$0x3]
          %880 = vset.pattern.permute.xlu0 0
          %881 = vperm.xlu0 %880, %v878
          %v882 = vpop.permute.xlu0 %881
          %v884 = vmul.f32 %v452, %v882
          %v885 = vmul.f32 %v453, %v882
          %v886 = vadd.f32 %v875, %v884
          %v887 = vadd.f32 %v876, %v885
          %s888 = scalar_lea.vmem %s2, 6
          %v889 = vld [vmem:[%s888] sm:$0x3]
          %v891 = vlaneseq
          %v892 = vshrl.u32 %v891, 7
          %v893 = vsub.s32 0, %v892
          %v894 = vrot.slane %v889, %v893
          %v895 = vlaneseq
          %v896 = vshrl.u32 %v895, 7
          %v897 = vsub.s32 1, %v896
          %v898 = vrot.slane %v889, %v897
          %v901 = vmul.f32 %v886, %v894
          %v902 = vmul.f32 %v887, %v898
          %v903 = vadd.f32 %v678, %v901
          %v904 = vadd.f32 %v679, %v902
          %s905 = scalar_lea.vmem %s0, 56
          %v906 = vld [vmem:[%s905] sm:$0x3]
          %908 = vset.pattern.permute.xlu0 0
          %909 = vperm.xlu0 %908, %v906
          %v910 = vpop.permute.xlu0 %909
          %v912 = vmul.f32 %v321, %v910
          %v913 = vmul.f32 %v322, %v910
          %s914 = scalar_lea.vmem %s0, 58
          %v915 = vld [vmem:[%s914] sm:$0x3]
          %917 = vset.pattern.permute.xlu0 0
          %918 = vperm.xlu0 %917, %v915
          %v919 = vpop.permute.xlu0 %918
          %v921 = vmul.f32 %v343, %v919
          %v922 = vmul.f32 %v344, %v919
          %s923 = scalar_lea.vmem %s0, 60
          %v924 = vld [vmem:[%s923] sm:$0x3]
          %926 = vset.pattern.permute.xlu0 0
          %927 = vperm.xlu0 %926, %v924
          %v928 = vpop.permute.xlu0 %927
          %v930 = vmul.f32 %v365, %v928
          %v931 = vmul.f32 %v366, %v928
          %v932 = vadd.f32 %v912, %v930
          %v933 = vadd.f32 %v913, %v931
          %s934 = scalar_lea.vmem %s0, 62
          %v935 = vld [vmem:[%s934] sm:$0x3]
          %937 = vset.pattern.permute.xlu0 0
          %938 = vperm.xlu0 %937, %v935
          %v939 = vpop.permute.xlu0 %938
          %v941 = vunpack.c.l.s4 269488144
          %v942 = vunpack.c.0.s8 %v941
          %v943 = vlaneseq
          %v944 = vshrl.u32 %v943, 7
          %v945 = vsub.s32 %v942, %v944
          %v946 = vrot.slane %v939, %v945
          %v948 = vmul.f32 %v387, %v946
          %v951 = vunpack.c.l.s4 1983009808
          %v952 = vunpack.c.0.s8 %v951
          %v953 = vlaneseq
          %v954 = vshrl.u32 %v953, 7
          %v955 = vsub.s32 %v952, %v954
          %v956 = vrot.slane %v948, %v955
          %v957 = vcombine.high %v956, %v956
          %v960 = vadd.f32 %v921, %v956
          %v961 = vadd.f32 %v922, %v957
          %s962 = scalar_lea.vmem %s0, 64
          %v963 = vld [vmem:[%s962] sm:$0x3]
          %965 = vset.pattern.permute.xlu0 0
          %966 = vperm.xlu0 %965, %v963
          %v967 = vpop.permute.xlu0 %966
          %v969 = vmul.f32 %v408, %v967
          %v970 = vmul.f32 %v409, %v967
          %v971 = vadd.f32 %v932, %v969
          %v972 = vadd.f32 %v933, %v970
          %s973 = scalar_lea.vmem %s0, 66
          %v974 = vld [vmem:[%s973] sm:$0x3]
          %976 = vset.pattern.permute.xlu0 0
          %977 = vperm.xlu0 %976, %v974
          %v978 = vpop.permute.xlu0 %977
          %v980 = vmul.f32 %v430, %v978
          %v981 = vmul.f32 %v431, %v978
          %v982 = vadd.f32 %v960, %v980
          %v983 = vadd.f32 %v961, %v981
          %v984 = vadd.f32 %v971, %v982
          %v985 = vadd.f32 %v972, %v983
          %s986 = scalar_lea.vmem %s0, 68
          %v987 = vld [vmem:[%s986] sm:$0x3]
          %989 = vset.pattern.permute.xlu0 0
          %990 = vperm.xlu0 %989, %v987
          %v991 = vpop.permute.xlu0 %990
          %v993 = vmul.f32 %v452, %v991
          %v994 = vmul.f32 %v453, %v991
          %v995 = vadd.f32 %v984, %v993
          %v996 = vadd.f32 %v985, %v994
          %997 = vrot.lane.b32.xlu0 %v995, 112
          %v998 = vpop.permute.xlu0 %997
          %999 = vrot.lane.b32.xlu0 %v996, 112
          %v1000 = vpop.permute.xlu0 %999
          %vm1001 = vcmp.lt.s32.totalorder %v305, 112
          %v1002 = vsel %vm1001, %v998, %v1000
          %v1003 = vsel %vm1001, %v1000, %v998
          %s1004 = scalar_lea.vmem %s2, 8
          %v1005 = vld [vmem:[%s1004] sm:$0x3]
          %v1007 = vlaneseq
          %v1008 = vshrl.u32 %v1007, 7
          %v1009 = vsub.s32 0, %v1008
          %v1010 = vrot.slane %v1005, %v1009
          %v1011 = vlaneseq
          %v1012 = vshrl.u32 %v1011, 7
          %v1013 = vsub.s32 1, %v1012
          %v1014 = vrot.slane %v1005, %v1013
          %v1017 = vmul.f32 %v1002, %v1010
          %v1018 = vmul.f32 %v1003, %v1014
          %v1019 = vadd.f32 %v794, %v1017
          %v1020 = vadd.f32 %v795, %v1018
          %s1021 = scalar_lea.vmem %s0, 70
          %v1022 = vld [vmem:[%s1021] sm:$0x3]
          %1024 = vset.pattern.permute.xlu0 0
          %1025 = vperm.xlu0 %1024, %v1022
          %v1026 = vpop.permute.xlu0 %1025
          %v1028 = vmul.f32 %v321, %v1026
          %v1029 = vmul.f32 %v322, %v1026
          %s1030 = scalar_lea.vmem %s0, 72
          %v1031 = vld [vmem:[%s1030] sm:$0x3]
          %1033 = vset.pattern.permute.xlu0 0
          %1034 = vperm.xlu0 %1033, %v1031
          %v1035 = vpop.permute.xlu0 %1034
          %v1037 = vmul.f32 %v343, %v1035
          %v1038 = vmul.f32 %v344, %v1035
          %s1039 = scalar_lea.vmem %s0, 74
          %v1040 = vld [vmem:[%s1039] sm:$0x3]
          %1042 = vset.pattern.permute.xlu0 0
          %1043 = vperm.xlu0 %1042, %v1040
          %v1044 = vpop.permute.xlu0 %1043
          %v1046 = vmul.f32 %v365, %v1044
          %v1047 = vmul.f32 %v366, %v1044
          %v1048 = vadd.f32 %v1028, %v1046
          %v1049 = vadd.f32 %v1029, %v1047
          %s1050 = scalar_lea.vmem %s0, 76
          %v1051 = vld [vmem:[%s1050] sm:$0x3]
          %1053 = vset.pattern.permute.xlu0 0
          %1054 = vperm.xlu0 %1053, %v1051
          %v1055 = vpop.permute.xlu0 %1054
          %v1057 = vunpack.c.l.s4 269488144
          %v1058 = vunpack.c.0.s8 %v1057
          %v1059 = vlaneseq
          %v1060 = vshrl.u32 %v1059, 7
          %v1061 = vsub.s32 %v1058, %v1060
          %v1062 = vrot.slane %v1055, %v1061
          %v1064 = vmul.f32 %v387, %v1062
          %v1067 = vunpack.c.l.s4 1983009808
          %v1068 = vunpack.c.0.s8 %v1067
          %v1069 = vlaneseq
          %v1070 = vshrl.u32 %v1069, 7
          %v1071 = vsub.s32 %v1068, %v1070
          %v1072 = vrot.slane %v1064, %v1071
          %v1073 = vcombine.high %v1072, %v1072
          %v1076 = vadd.f32 %v1037, %v1072
          %v1077 = vadd.f32 %v1038, %v1073
          %s1078 = scalar_lea.vmem %s0, 78
          %v1079 = vld [vmem:[%s1078] sm:$0x3]
          %1081 = vset.pattern.permute.xlu0 0
          %1082 = vperm.xlu0 %1081, %v1079
          %v1083 = vpop.permute.xlu0 %1082
          %v1085 = vmul.f32 %v408, %v1083
          %v1086 = vmul.f32 %v409, %v1083
          %v1087 = vadd.f32 %v1048, %v1085
          %v1088 = vadd.f32 %v1049, %v1086
          %s1089 = scalar_lea.vmem %s0, 80
          %v1090 = vld [vmem:[%s1089] sm:$0x3]
          %1092 = vset.pattern.permute.xlu0 0
          %1093 = vperm.xlu0 %1092, %v1090
          %v1094 = vpop.permute.xlu0 %1093
          %v1096 = vmul.f32 %v430, %v1094
          %v1097 = vmul.f32 %v431, %v1094
          %v1098 = vadd.f32 %v1076, %v1096
          %v1099 = vadd.f32 %v1077, %v1097
          %v1100 = vadd.f32 %v1087, %v1098
          %v1101 = vadd.f32 %v1088, %v1099
          %s1102 = scalar_lea.vmem %s0, 82
          %v1103 = vld [vmem:[%s1102] sm:$0x3]
          %1105 = vset.pattern.permute.xlu0 0
          %1106 = vperm.xlu0 %1105, %v1103
          %v1107 = vpop.permute.xlu0 %1106
          %v1109 = vmul.f32 %v452, %v1107
          %v1110 = vmul.f32 %v453, %v1107
          %v1111 = vadd.f32 %v1100, %v1109
          %v1112 = vadd.f32 %v1101, %v1110
          %1113 = vrot.lane.b32.xlu0 %v1111, 96
          %v1114 = vpop.permute.xlu0 %1113
          %1115 = vrot.lane.b32.xlu0 %v1112, 96
          %v1116 = vpop.permute.xlu0 %1115
          %vm1117 = vcmp.lt.s32.totalorder %v305, 96
          %v1118 = vsel %vm1117, %v1114, %v1116
          %v1119 = vsel %vm1117, %v1116, %v1114
          %s1120 = scalar_lea.vmem %s2, 10
          %v1121 = vld [vmem:[%s1120] sm:$0x3]
          %v1123 = vlaneseq
          %v1124 = vshrl.u32 %v1123, 7
          %v1125 = vsub.s32 0, %v1124
          %v1126 = vrot.slane %v1121, %v1125
          %v1127 = vlaneseq
          %v1128 = vshrl.u32 %v1127, 7
          %v1129 = vsub.s32 1, %v1128
          %v1130 = vrot.slane %v1121, %v1129
          %v1133 = vmul.f32 %v1118, %v1126
          %v1134 = vmul.f32 %v1119, %v1130
          %v1135 = vadd.f32 %v903, %v1133
          %v1136 = vadd.f32 %v904, %v1134
          %s1137 = scalar_lea.vmem %s0, 84
          %v1138 = vld [vmem:[%s1137] sm:$0x3]
          %1140 = vset.pattern.permute.xlu0 0
          %1141 = vperm.xlu0 %1140, %v1138
          %v1142 = vpop.permute.xlu0 %1141
          %v1144 = vmul.f32 %v321, %v1142
          %v1145 = vmul.f32 %v322, %v1142
          %s1146 = scalar_lea.vmem %s0, 86
          %v1147 = vld [vmem:[%s1146] sm:$0x3]
          %1149 = vset.pattern.permute.xlu0 0
          %1150 = vperm.xlu0 %1149, %v1147
          %v1151 = vpop.permute.xlu0 %1150
          %v1153 = vmul.f32 %v343, %v1151
          %v1154 = vmul.f32 %v344, %v1151
          %s1155 = scalar_lea.vmem %s0, 88
          %v1156 = vld [vmem:[%s1155] sm:$0x3]
          %1158 = vset.pattern.permute.xlu0 0
          %1159 = vperm.xlu0 %1158, %v1156
          %v1160 = vpop.permute.xlu0 %1159
          %v1162 = vmul.f32 %v365, %v1160
          %v1163 = vmul.f32 %v366, %v1160
          %v1164 = vadd.f32 %v1144, %v1162
          %v1165 = vadd.f32 %v1145, %v1163
          %s1166 = scalar_lea.vmem %s0, 90
          %v1167 = vld [vmem:[%s1166] sm:$0x3]
          %1169 = vset.pattern.permute.xlu0 0
          %1170 = vperm.xlu0 %1169, %v1167
          %v1171 = vpop.permute.xlu0 %1170
          %v1173 = vunpack.c.l.s4 269488144
          %v1174 = vunpack.c.0.s8 %v1173
          %v1175 = vlaneseq
          %v1176 = vshrl.u32 %v1175, 7
          %v1177 = vsub.s32 %v1174, %v1176
          %v1178 = vrot.slane %v1171, %v1177
          %v1180 = vmul.f32 %v387, %v1178
          %v1183 = vunpack.c.l.s4 1983009808
          %v1184 = vunpack.c.0.s8 %v1183
          %v1185 = vlaneseq
          %v1186 = vshrl.u32 %v1185, 7
          %v1187 = vsub.s32 %v1184, %v1186
          %v1188 = vrot.slane %v1180, %v1187
          %v1189 = vcombine.high %v1188, %v1188
          %v1192 = vadd.f32 %v1153, %v1188
          %v1193 = vadd.f32 %v1154, %v1189
          %s1194 = scalar_lea.vmem %s0, 92
          %v1195 = vld [vmem:[%s1194] sm:$0x3]
          %1197 = vset.pattern.permute.xlu0 0
          %1198 = vperm.xlu0 %1197, %v1195
          %v1199 = vpop.permute.xlu0 %1198
          %v1201 = vmul.f32 %v408, %v1199
          %v1202 = vmul.f32 %v409, %v1199
          %v1203 = vadd.f32 %v1164, %v1201
          %v1204 = vadd.f32 %v1165, %v1202
          %s1205 = scalar_lea.vmem %s0, 94
          %v1206 = vld [vmem:[%s1205] sm:$0x3]
          %1208 = vset.pattern.permute.xlu0 0
          %1209 = vperm.xlu0 %1208, %v1206
          %v1210 = vpop.permute.xlu0 %1209
          %v1212 = vmul.f32 %v430, %v1210
          %v1213 = vmul.f32 %v431, %v1210
          %v1214 = vadd.f32 %v1192, %v1212
          %v1215 = vadd.f32 %v1193, %v1213
          %v1216 = vadd.f32 %v1203, %v1214
          %v1217 = vadd.f32 %v1204, %v1215
          %s1218 = scalar_lea.vmem %s0, 96
          %v1219 = vld [vmem:[%s1218] sm:$0x3]
          %1221 = vset.pattern.permute.xlu0 0
          %1222 = vperm.xlu0 %1221, %v1219
          %v1223 = vpop.permute.xlu0 %1222
          %v1225 = vmul.f32 %v452, %v1223
          %v1226 = vmul.f32 %v453, %v1223
          %v1227 = vadd.f32 %v1216, %v1225
          %v1228 = vadd.f32 %v1217, %v1226
          %1229 = vrot.lane.b32.xlu0 %v1227, 80
          %v1230 = vpop.permute.xlu0 %1229
          %1231 = vrot.lane.b32.xlu0 %v1228, 80
          %v1232 = vpop.permute.xlu0 %1231
          %vm1233 = vcmp.lt.s32.totalorder %v305, 80
          %v1234 = vsel %vm1233, %v1230, %v1232
          %v1235 = vsel %vm1233, %v1232, %v1230
          %s1236 = scalar_lea.vmem %s2, 12
          %v1237 = vld [vmem:[%s1236] sm:$0x3]
          %v1239 = vlaneseq
          %v1240 = vshrl.u32 %v1239, 7
          %v1241 = vsub.s32 0, %v1240
          %v1242 = vrot.slane %v1237, %v1241
          %v1243 = vlaneseq
          %v1244 = vshrl.u32 %v1243, 7
          %v1245 = vsub.s32 1, %v1244
          %v1246 = vrot.slane %v1237, %v1245
          %v1249 = vmul.f32 %v1234, %v1242
          %v1250 = vmul.f32 %v1235, %v1246
          %v1251 = vadd.f32 %v1019, %v1249
          %v1252 = vadd.f32 %v1020, %v1250
          %v1253 = vadd.f32 %v1251, %v1135
          %v1254 = vadd.f32 %v1252, %v1136
          %v1257 = vrot.slane %v1253, 1
          %v1258 = vrot.slane %v1254, 1
          %v1261 = vadd.f32 %v1253, %v1257
          %v1262 = vadd.f32 %v1254, %v1258
          %s1263 = sld [smem:[#allocation3]]
          %v1264 = vstv %s1263
          %v1265 = vadd.f32 %v1261, %v1264
          %v1266 = vadd.f32 %v1262, %v1264
          %v1267 = vsub.f32 0.0, %v1265
          %v1268 = vsub.f32 0.0, %v1266
          %v1269 = vmul.f32 %v1267, 1.442695
          %v1270 = vpow.pop %v1269
          %v1271 = vmul.f32 %v1268, 1.442695
          %v1272 = vpow.pop %v1271
          %v1273 = vadd.f32 %v1270, 1.0
          %v1274 = vadd.f32 %v1272, 1.0
          %v1275 = vrcp.pop %v1273
          %v1276 = vmul.f32 1.0, %v1275
          %v1277 = vrcp.pop %v1274
          %v1278 = vmul.f32 1.0, %v1277
          %v1281 = vcombine.low %v1276, %v1278
          %v1283 = vunpack.c.l.s4 1966171168
          %v1284 = vunpack.c.0.s8 %v1283
          %v1285 = vlaneseq
          %v1286 = vshrl.u32 %v1285, 7
          %v1287 = vsub.s32 %v1284, %v1286
          %v1288 = vrot.slane %v1281, %v1287
          %v1290 = vunpack.c.l.s4 1966171168
          %v1291 = vunpack.c.0.s8 %v1290
          %v1292 = vlaneseq
          %v1293 = vshrl.u32 %v1292, 7
          %v1294 = vsub.s32 %v1291, %v1293
          %v1295 = vrot.slane %v1288, %v1294
          %1297 = vst.msk [vmem:[%s240] sm:$0x3] %vm282, %v1295
        $region48: #{tpu_custom_call.1} parent=39 // pred_fallthru
          _
        %s1298 = sand.u32 %s152, 1
        %s1299 = scalar_lea.sflag [#allocation5], %s1298
        %s1300 = sand.u32 %s152, 1
        %s1301 = smul.addr %s1300, 2
        %s1302 = scalar_lea.vmem [#allocation4], %s1301
        // Predicated region
        $region49: #{tpu_custom_call.1} parent=39 // pred_check
          %p1303 = pneg %p162
        $region50: #{tpu_custom_call.1} parent=39 // pred_check_branch
          %1305 = sbr.rel (%p1303) target = $region52
        $region51: #{tpu_custom_call.1} parent=39 // pred_region
          %s1307 = ssub.s32 32, 32
          %1308 = vsyncadd %s1299, %s1307
          %s1309 = smul.addr %s24, 2
          %s1310 = smul.addr %s1309, 16
          %s1311 = scalar_lea.hbm %s5, %s1310
          %s1313 = sshll.u32 %s1302, 4
          %s1314 = int_to_ptr.vmem [resolvable:$true] %s1313
          %1316 = dma.vmem_to_hbm [thread:$0]  %s1314, 32, %s1311, %s1299
        $region52: #{tpu_custom_call.1} parent=39 // pred_fallthru
          _
      $region40: #{tpu_custom_call.1} parent=5 // pred_fallthru
        _
      %p1317 = scmp.le.s32.totalorder 2, %s15
      // Predicated region
      $region53: #{tpu_custom_call.1} parent=5 // pred_check
        %p1318 = pneg %p1317
      $region54: #{tpu_custom_call.1} parent=5 // pred_check_branch
        %1320 = sbr.rel (%p1318) target = $region56
      $region55: #{tpu_custom_call.1} parent=5 // pred_region
        %s1321 = ssub.s32 %s15, 2
        // Predicated region
        $region57: #{tpu_custom_call.1} parent=55 // pred_check
          %p1322 = pneg %p168
        $region58: #{tpu_custom_call.1} parent=55 // pred_check_branch
          %1324 = sbr.rel (%p1322) target = $region60
        $region59: #{tpu_custom_call.1} parent=55 // pred_region
          %s1325 = sand.u32 %s153, 1
          %s1326 = scalar_lea.sflag [#allocation5], %s1325
          %s1327 = sand.u32 %s153, 1
          %s1328 = smul.addr %s1327, 2
          %s1329 = scalar_lea.vmem [#allocation4], %s1328
          %1330 = dma.done %s1326, 32
        $region60: #{tpu_custom_call.1} parent=55 // pred_fallthru
          _
      $region56: #{tpu_custom_call.1} parent=5 // pred_fallthru
        _
    $region6: #{tpu_custom_call.1} parent=1 // loop_footer
      %s19 = sadd.s32 1, %s15
    $region7: #{tpu_custom_call.1} parent=1 // loop_footer_branch
      %14 = sbr.rel target = $region3
    $region8: #{tpu_custom_call.1} parent=1 // loop_exit
      _
    %1331 = vsyncpa [#allocation5], 1
    %s1332 = scalar_lea.sflag [#allocation5], 1
    %1333 = vsyncpa %s1332, 1

</llo_original>
